<compile_context>
chip_gen: v5e
topology: v5e:2x2
jax: 0.10.0
libtpu: 0.0.40
codegen_flags: <defaults>
</compile_context>

<pallas_src>
import jax
import jax.numpy as jnp
from jax.experimental import pallas as pl
from jax.experimental.pallas import tpu as pltpu


def mlp_kernel(x_ref, w1_ref, b1_ref, w2_ref, b2_ref, w3_ref, b3_ref, o_ref):
    # x_ref: (1, tb)   w1/b1: (512, 1)   w2: (256, 512)   b2/w3: (256, 1)
    # b3: (1, 1) in SMEM                 o_ref: (1, tb)
    x = x_ref[...]                                                  # (1, tb)

    # Layer 1 (in_features=1): outer product on the VPU, not a degenerate
    # K=1 MXU matmul.
    h1 = jnp.maximum(w1_ref[...] * x + b1_ref[...], 0.0)           # (512, tb)

    # Layer 2: dense MXU matmul, M=256, K=512, N=tb (all 128/256-aligned).
    h2 = jnp.dot(w2_ref[...], h1, preferred_element_type=jnp.float32)
    h2 = jnp.maximum(h2 + b2_ref[...], 0.0)                        # (256, tb)

    # Layer 3 (out_features=1): elementwise multiply + sublane reduction
    # (XLU) instead of an N=1 MXU matmul.
    o_ref[...] = (
        jnp.sum(w3_ref[...] * h2, axis=0, keepdims=True) + b3_ref[0, 0]
    )                                                               # (1, tb)


def function_approximator(x, params, *, tb=1024):
    """x: (B, 1) float32.  params: dict with
         w1 (512,1), b1 (512,1), w2 (256,512), b2 (256,1), w3 (256,1), b3 (1,1).
       Returns (B, 1) float32, matching the PyTorch forward pass."""
    B = x.shape[0]
    # Batch tile must be lane-aligned; pad the batch instead of asserting.
    tb = max(128, (tb // 128) * 128)
    n_tiles = pl.cdiv(B, tb)
    B_pad = n_tiles * tb

    # Transpose to features-by-batch and zero-pad the batch (lane) axis.
    x_t = jnp.zeros((1, B_pad), jnp.float32).at[0, :B].set(x[:, 0])

    w1, b1 = params["w1"], params["b1"]
    w2, b2 = params["w2"], params["b2"]
    w3, b3 = params["w3"], params["b3"]

    const = lambda shape: pl.BlockSpec(shape, lambda i: (0, 0))  # grid-invariant

    out_t = pl.pallas_call(
        mlp_kernel,
        out_shape=jax.ShapeDtypeStruct((1, B_pad), jnp.float32),
        grid_spec=pltpu.PrefetchScalarGridSpec(
            num_scalar_prefetch=0,
            grid=(n_tiles,),
            in_specs=[
                pl.BlockSpec((1, tb), lambda i: (0, i)),         # x tile (lane-dense)
                const(w1.shape), const(b1.shape),                # layer 1
                const(w2.shape), const(b2.shape),                # layer 2
                const(w3.shape),                                 # layer 3 weight
                pl.BlockSpec(memory_space=pltpu.MemorySpace.SMEM),  # b3 scalar
            ],
            out_specs=pl.BlockSpec((1, tb), lambda i: (0, i)),   # out tile (lane-dense)
        ),
        compiler_params=pltpu.CompilerParams(
            dimension_semantics=("parallel",),          # megacore-shardable on v7x
            vmem_limit_bytes=48 * 1024 * 1024,          # headroom for large tb
        ),
    )(x_t, w1, b1, w2, b2, w3, b3)

    return out_t[0, :B][:, None]                                  # (B, 1)


def init_params(key):
    """Deterministic init matching the PyTorch module.
    layer1/layer2 weights: kaiming_normal (std = sqrt(2/fan_in)); output layer
    and all biases: PyTorch Linear default uniform(-1/sqrt(fan_in), 1/sqrt(fan_in)).
    Weights stored as (out_features, in_features) columns to match the
    features-by-batch kernel layout."""
    ks = jax.random.split(key, 6)

    def kaiming_normal(k, fan_in, shape):
        std = (2.0 / fan_in) ** 0.5
        return std * jax.random.normal(k, shape, dtype=jnp.float32)

    def default_uniform(k, fan_in, shape):
        bound = 1.0 / (fan_in ** 0.5)
        return jax.random.uniform(k, shape, jnp.float32, -bound, bound)

    return {
        "w1": kaiming_normal(ks[0], 1, (512, 1)),        # layer1.weight (512,1)
        "b1": default_uniform(ks[1], 1, (512, 1)),
        "w2": kaiming_normal(ks[2], 512, (256, 512)),    # layer2.weight (256,512)
        "b2": default_uniform(ks[3], 512, (256, 1)),
        "w3": default_uniform(ks[4], 256, (256, 1)),     # output_layer.weight^T
        "b3": default_uniform(ks[5], 256, (1, 1)),
    }


def reference(x, p):
    """Pure-JAX reference in the original (batch, features) orientation."""
    h1 = jnp.maximum(x @ p["w1"].T + p["b1"].T, 0.0)     # (B, 512)
    h2 = jnp.maximum(h1 @ p["w2"].T + p["b2"].T, 0.0)    # (B, 256)
    return h2 @ p["w3"] + p["b3"]                        # (B, 1)


if __name__ == "__main__":
    key = jax.random.PRNGKey(0)
    pkey, xkey = jax.random.split(key)
    params = init_params(pkey)

    # Small demo shape; B deliberately NOT a multiple of the tile to exercise
    # the padding path, and > tb so the grid has 2 blocks.
    B = 300
    x = jax.random.normal(xkey, (B, 1), dtype=jnp.float32)

    out = function_approximator(x, params, tb=256)
    out = jax.block_until_ready(out)

    ref = reference(x, params)
    assert out.shape == (B, 1)
    assert jnp.allclose(out, ref, atol=1e-4, rtol=1e-4), "mismatch vs reference"
    print("KERNEL_OK")
</pallas_src>

<mosaic_0001>
module attributes {stable_mosaic.version = 11 : i64} {
  func.func @mlp_kernel(%arg0: i32, %arg1: memref<1x256xf32, #tpu.memory_space<vmem>>, %arg2: memref<512x1xf32, #tpu.memory_space<vmem>>, %arg3: memref<512x1xf32, #tpu.memory_space<vmem>>, %arg4: memref<256x512xf32, #tpu.memory_space<vmem>>, %arg5: memref<256x1xf32, #tpu.memory_space<vmem>>, %arg6: memref<256x1xf32, #tpu.memory_space<vmem>>, %arg7: memref<1x1xf32, #tpu.memory_space<smem>>, %arg8: memref<1x256xf32, #tpu.memory_space<vmem>>) attributes {dimension_semantics = [#tpu.dimension_semantics<parallel>], iteration_bounds = array<i64: 2>, scalar_prefetch = 0 : i64, scratch_operands = 0 : i64, tpu.core_type = #tpu.core_type<tc>, window_params = [{transform_indices = @transform_0, window_bounds = array<i64: 1, 256>}, {pipeline_mode = #tpu.pipeline_mode<synchronous>, transform_indices = @transform_1, window_bounds = array<i64: 512, 1>}, {pipeline_mode = #tpu.pipeline_mode<synchronous>, transform_indices = @transform_2, window_bounds = array<i64: 512, 1>}, {pipeline_mode = #tpu.pipeline_mode<synchronous>, transform_indices = @transform_3, window_bounds = array<i64: 256, 512>}, {pipeline_mode = #tpu.pipeline_mode<synchronous>, transform_indices = @transform_4, window_bounds = array<i64: 256, 1>}, {pipeline_mode = #tpu.pipeline_mode<synchronous>, transform_indices = @transform_5, window_bounds = array<i64: 256, 1>}, {transform_indices = @transform_6, window_bounds = array<i64: 1, 1>}, {transform_indices = @transform_7, window_bounds = array<i64: 1, 256>}]} {
    %c0 = arith.constant 0 : index
    %c0_0 = arith.constant 0 : index
    %0 = vector.load %arg1[%c0, %c0_0] : memref<1x256xf32, #tpu.memory_space<vmem>>, vector<1x256xf32>
    %c0_1 = arith.constant 0 : index
    %c0_2 = arith.constant 0 : index
    %1 = vector.load %arg2[%c0_1, %c0_2] : memref<512x1xf32, #tpu.memory_space<vmem>>, vector<512x1xf32>
    %2 = vector.broadcast %1 : vector<512x1xf32> to vector<512x256xf32>
    %3 = vector.broadcast %0 : vector<1x256xf32> to vector<512x256xf32>
    %4 = arith.mulf %2, %3 : vector<512x256xf32>
    %c0_3 = arith.constant 0 : index
    %c0_4 = arith.constant 0 : index
    %5 = vector.load %arg3[%c0_3, %c0_4] : memref<512x1xf32, #tpu.memory_space<vmem>>, vector<512x1xf32>
    %6 = vector.broadcast %5 : vector<512x1xf32> to vector<512x256xf32>
    %7 = arith.addf %4, %6 : vector<512x256xf32>
    %cst = arith.constant 0.000000e+00 : f32
    %8 = vector.broadcast %cst : f32 to vector<512x256xf32>
    %9 = arith.maximumf %7, %8 : vector<512x256xf32>
    %c0_5 = arith.constant 0 : index
    %c0_6 = arith.constant 0 : index
    %10 = vector.load %arg4[%c0_5, %c0_6] : memref<256x512xf32, #tpu.memory_space<vmem>>, vector<256x512xf32>
    %cst_7 = arith.constant dense<0.000000e+00> : vector<256x256xf32>
    %11 = tpu.matmul %10, %9, %cst_7 {dimension_numbers = #tpu.dot_dimension_numbers<[1], [0], [0], [1], [0, 0, 1, 1], [], []>} : vector<256x512xf32>, vector<512x256xf32>, vector<256x256xf32> -> vector<256x256xf32>
    %c0_8 = arith.constant 0 : index
    %c0_9 = arith.constant 0 : index
    %12 = vector.load %arg5[%c0_8, %c0_9] : memref<256x1xf32, #tpu.memory_space<vmem>>, vector<256x1xf32>
    %13 = vector.broadcast %12 : vector<256x1xf32> to vector<256x256xf32>
    %14 = arith.addf %11, %13 : vector<256x256xf32>
    %cst_10 = arith.constant 0.000000e+00 : f32
    %15 = vector.broadcast %cst_10 : f32 to vector<256x256xf32>
    %16 = arith.maximumf %14, %15 : vector<256x256xf32>
    %c0_11 = arith.constant 0 : index
    %c0_12 = arith.constant 0 : index
    %17 = vector.load %arg6[%c0_11, %c0_12] : memref<256x1xf32, #tpu.memory_space<vmem>>, vector<256x1xf32>
    %18 = vector.broadcast %17 : vector<256x1xf32> to vector<256x256xf32>
    %19 = arith.mulf %18, %16 : vector<256x256xf32>
    %cst_13 = arith.constant dense<0.000000e+00> : vector<256xf32>
    %20 = vector.multi_reduction <add>, %19, %cst_13 [0] : vector<256x256xf32> to vector<256xf32>
    %21 = vector.shape_cast %20 : vector<256xf32> to vector<1x256xf32>
    %c0_14 = arith.constant 0 : index
    %c0_15 = arith.constant 0 : index
    %22 = memref.load %arg7[%c0_14, %c0_15] : memref<1x1xf32, #tpu.memory_space<smem>>
    %23 = vector.broadcast %22 : f32 to vector<1x256xf32>
    %24 = arith.addf %21, %23 : vector<1x256xf32>
    %c0_16 = arith.constant 0 : index
    %c0_17 = arith.constant 0 : index
    %25 = vector.load %arg8[%c0_16, %c0_17] : memref<1x256xf32, #tpu.memory_space<vmem>>, vector<1x256xf32>
    tpu.vector_store %arg8[%c0_16, %c0_17], %24 {strides = array<i32>} : memref<1x256xf32, #tpu.memory_space<vmem>>, vector<1x256xf32>,
    return
  }
  func.func @transform_0(%arg0: i32) -> (i32, i32) {
    %c0_i32 = arith.constant 0 : i32
    %c0_i32_0 = arith.constant 0 : i32
    return %c0_i32, %arg0 : i32, i32
  }
  func.func @transform_1(%arg0: i32) -> (i32, i32) {
    %c0_i32 = arith.constant 0 : i32
    %c0_i32_0 = arith.constant 0 : i32
    %c0_i32_1 = arith.constant 0 : i32
    return %c0_i32, %c0_i32_0 : i32, i32
  }
  func.func @transform_2(%arg0: i32) -> (i32, i32) {
    %c0_i32 = arith.constant 0 : i32
    %c0_i32_0 = arith.constant 0 : i32
    %c0_i32_1 = arith.constant 0 : i32
    return %c0_i32, %c0_i32_0 : i32, i32
  }
  func.func @transform_3(%arg0: i32) -> (i32, i32) {
    %c0_i32 = arith.constant 0 : i32
    %c0_i32_0 = arith.constant 0 : i32
    %c0_i32_1 = arith.constant 0 : i32
    return %c0_i32, %c0_i32_0 : i32, i32
  }
  func.func @transform_4(%arg0: i32) -> (i32, i32) {
    %c0_i32 = arith.constant 0 : i32
    %c0_i32_0 = arith.constant 0 : i32
    %c0_i32_1 = arith.constant 0 : i32
    return %c0_i32, %c0_i32_0 : i32, i32
  }
  func.func @transform_5(%arg0: i32) -> (i32, i32) {
    %c0_i32 = arith.constant 0 : i32
    %c0_i32_0 = arith.constant 0 : i32
    %c0_i32_1 = arith.constant 0 : i32
    return %c0_i32, %c0_i32_0 : i32, i32
  }
  func.func @transform_6(%arg0: i32) -> (i32, i32) {
    %c0_i32 = arith.constant 0 : i32
    %c0_i32_0 = arith.constant 0 : i32
    %c0_i32_1 = arith.constant 0 : i32
    return %c0_i32, %c0_i32_0 : i32, i32
  }
  func.func @transform_7(%arg0: i32) -> (i32, i32) {
    %c0_i32 = arith.constant 0 : i32
    %c0_i32_0 = arith.constant 0 : i32
    return %c0_i32, %arg0 : i32, i32
  }
}

</mosaic_0001>

<llo_original>
// kernel: tpu_custom_call.1
$region0: #{tpu_custom_call.1}
  #allocation0 [shape = 'u32[]', space=smem, size = 0x4, offset = 0x4, fixed_abs, tag = 'smem constant byte address 0x4 - core index']
  #allocation1 [shape = 'u32[72,128]{1,0:T(1,128)}', space=vmem, size = 0x9000, scoped, tag = 'internal scratch']
  #allocation2 [shape = 'f32[1,1]{1,0:T(1,128)S(6)}', space=smem, size = 0x200, scoped, tag = 'scoped memory for tpu_custom_call.1']
  %s0 = inlined_call_operand.vmem [shape: f32[1,512], index: 0, kind: input, shape index: {}]
  %s1 = inlined_call_operand.vmem [shape: f32[512,1], index: 1, kind: input, shape index: {}]
  %s2 = inlined_call_operand.vmem [shape: f32[512,1], index: 2, kind: input, shape index: {}]
  %s3 = inlined_call_operand.vmem [shape: f32[256,512], index: 3, kind: input, shape index: {}]
  %s4 = inlined_call_operand.vmem [shape: f32[256,1], index: 4, kind: input, shape index: {}]
  %s5 = inlined_call_operand.vmem [shape: f32[256,1], index: 5, kind: input, shape index: {}]
  %s6 = inlined_call_operand.<no memory space> [shape: f32[1,1], index: 6, kind: input, shape index: {}]
  %s7 = inlined_call_operand.hbm [shape: f32[1,512], index: 7, kind: output, shape index: {}]
  %s8 = sld [smem:[#allocation0]]
  $region61: #{tpu_custom_call.1} parent=0
    _
  %s10 = ssub.s32 1, %s8
  %s11 = scalar_select 0, %s10, %s8
  %12 = sst [smem:[#allocation2]] %s6
  $region1: #{tpu_custom_call.1} parent=0
    #allocation3 [shape = 'u8[2048]{0}', space=vmem, size = 0x800, scoped, tag = 'output window, operand 0']
    #allocation4 [shape = 's32[2]{0}', space=sflag, size = 0x8, scoped, tag = 'scoped memory for tpu_custom_call.1']
    %13 = vsyncpa [#allocation4], 0
    %s14 = scalar_lea.sflag [#allocation4], 1
    %15 = vsyncpa %s14, 0
    loop: start=0, step=1, limit=4
    $region2: #{tpu_custom_call.1} parent=1 // loop_pre_header
      _
    $region3: #{tpu_custom_call.1} parent=1 // loop_header
      %s17 = sphi 0, %s21
      %p18 = scmp.ge.s32.totalorder %s17, 4
      %s27 = sphi 0, %s29
      %s30 = sphi 0, %s27
      %s31 = sphi 0, %s30
      %s47 = sphi 0, %s31
      %s51 = sphi 0, %s51
      %s53 = sphi 0, %s51
      %s54 = sphi 0, %s53
      %s68 = sphi 0, %s54
      %s72 = sphi 0, %s72
      %s74 = sphi 0, %s72
      %s75 = sphi 0, %s74
      %s89 = sphi 0, %s75
      %s93 = sphi 0, %s93
      %s95 = sphi 0, %s93
      %s96 = sphi 0, %s95
      %s110 = sphi 0, %s96
      %s114 = sphi 0, %s114
      %s116 = sphi 0, %s114
      %s117 = sphi 0, %s116
      %s131 = sphi 0, %s117
      %s135 = sphi 0, %s135
      %s137 = sphi 0, %s135
      %s138 = sphi 0, %s137
      %s152 = sphi 0, %s138
      %s156 = sphi 0, %s156
      %s158 = sphi 0, %s156
      %s159 = sphi 0, %s158
      %s173 = sphi 0, %s159
      %s179 = sphi 0, %s181
      %s182 = sphi 0, %s179
      %s183 = sphi 0, %s182
      %s199 = sphi 0, %s183
    $region4: #{tpu_custom_call.1} parent=1 // loop_header_branch
      %20 = sbr.rel (%p18) target = $region8
    $region5: #{tpu_custom_call.1} parent=1 // loop_body
      %s22 = ssub.s32 %s17, 1
      %s23 = ssub.s32 %s17, 2
      %s24 = sadd.s32 %s17, 1
      %s25 = ssub.s32 %s17, %s24
      %p26 = scmp.eq.s32.totalorder %s25, 0
      %s28 = sadd.s32 %s27, 1
      %s29 = scalar_select %p26, %s27, %s28
      %p32 = pneg %p26
      %p33 = scmp.eq.s32.totalorder %s17, 1
      %p34 = por %p32, %p33
      %p35 = scmp.ne.s32.totalorder %s27, %s30
      %p36 = scmp.eq.s32.totalorder %s17, 0
      %p37 = por %p35, %p36
      %p38 = scmp.ne.s32.totalorder %s27, %s30
      %p39 = scmp.eq.s32.totalorder %s22, 1
      %p40 = por %p38, %p39
      %p41 = scmp.ne.s32.totalorder %s30, %s31
      %p42 = scmp.eq.s32.totalorder %s22, 0
      %p43 = por %p41, %p42
      %p44 = scmp.ne.s32.totalorder %s30, %s31
      %p45 = scmp.eq.s32.totalorder %s23, 1
      %p46 = por %p44, %p45
      %p48 = scmp.ne.s32.totalorder %s31, %s47
      %p49 = scmp.eq.s32.totalorder %s23, 0
      %p50 = por %p48, %p49
      %s52 = sadd.s32 %s51, 1
      %p55 = scmp.eq.s32.totalorder %s17, 1
      %p56 = scmp.ne.s32.totalorder %s51, %s53
      %p57 = scmp.eq.s32.totalorder %s17, 0
      %p58 = por %p56, %p57
      %p59 = scmp.ne.s32.totalorder %s51, %s53
      %p60 = scmp.eq.s32.totalorder %s22, 1
      %p61 = por %p59, %p60
      %p62 = scmp.ne.s32.totalorder %s53, %s54
      %p63 = scmp.eq.s32.totalorder %s22, 0
      %p64 = por %p62, %p63
      %p65 = scmp.ne.s32.totalorder %s53, %s54
      %p66 = scmp.eq.s32.totalorder %s23, 1
      %p67 = por %p65, %p66
      %p69 = scmp.ne.s32.totalorder %s54, %s68
      %p70 = scmp.eq.s32.totalorder %s23, 0
      %p71 = por %p69, %p70
      %s73 = sadd.s32 %s72, 1
      %p76 = scmp.eq.s32.totalorder %s17, 1
      %p77 = scmp.ne.s32.totalorder %s72, %s74
      %p78 = scmp.eq.s32.totalorder %s17, 0
      %p79 = por %p77, %p78
      %p80 = scmp.ne.s32.totalorder %s72, %s74
      %p81 = scmp.eq.s32.totalorder %s22, 1
      %p82 = por %p80, %p81
      %p83 = scmp.ne.s32.totalorder %s74, %s75
      %p84 = scmp.eq.s32.totalorder %s22, 0
      %p85 = por %p83, %p84
      %p86 = scmp.ne.s32.totalorder %s74, %s75
      %p87 = scmp.eq.s32.totalorder %s23, 1
      %p88 = por %p86, %p87
      %p90 = scmp.ne.s32.totalorder %s75, %s89
      %p91 = scmp.eq.s32.totalorder %s23, 0
      %p92 = por %p90, %p91
      %s94 = sadd.s32 %s93, 1
      %p97 = scmp.eq.s32.totalorder %s17, 1
      %p98 = scmp.ne.s32.totalorder %s93, %s95
      %p99 = scmp.eq.s32.totalorder %s17, 0
      %p100 = por %p98, %p99
      %p101 = scmp.ne.s32.totalorder %s93, %s95
      %p102 = scmp.eq.s32.totalorder %s22, 1
      %p103 = por %p101, %p102
      %p104 = scmp.ne.s32.totalorder %s95, %s96
      %p105 = scmp.eq.s32.totalorder %s22, 0
      %p106 = por %p104, %p105
      %p107 = scmp.ne.s32.totalorder %s95, %s96
      %p108 = scmp.eq.s32.totalorder %s23, 1
      %p109 = por %p107, %p108
      %p111 = scmp.ne.s32.totalorder %s96, %s110
      %p112 = scmp.eq.s32.totalorder %s23, 0
      %p113 = por %p111, %p112
      %s115 = sadd.s32 %s114, 1
      %p118 = scmp.eq.s32.totalorder %s17, 1
      %p119 = scmp.ne.s32.totalorder %s114, %s116
      %p120 = scmp.eq.s32.totalorder %s17, 0
      %p121 = por %p119, %p120
      %p122 = scmp.ne.s32.totalorder %s114, %s116
      %p123 = scmp.eq.s32.totalorder %s22, 1
      %p124 = por %p122, %p123
      %p125 = scmp.ne.s32.totalorder %s116, %s117
      %p126 = scmp.eq.s32.totalorder %s22, 0
      %p127 = por %p125, %p126
      %p128 = scmp.ne.s32.totalorder %s116, %s117
      %p129 = scmp.eq.s32.totalorder %s23, 1
      %p130 = por %p128, %p129
      %p132 = scmp.ne.s32.totalorder %s117, %s131
      %p133 = scmp.eq.s32.totalorder %s23, 0
      %p134 = por %p132, %p133
      %s136 = sadd.s32 %s135, 1
      %p139 = scmp.eq.s32.totalorder %s17, 1
      %p140 = scmp.ne.s32.totalorder %s135, %s137
      %p141 = scmp.eq.s32.totalorder %s17, 0
      %p142 = por %p140, %p141
      %p143 = scmp.ne.s32.totalorder %s135, %s137
      %p144 = scmp.eq.s32.totalorder %s22, 1
      %p145 = por %p143, %p144
      %p146 = scmp.ne.s32.totalorder %s137, %s138
      %p147 = scmp.eq.s32.totalorder %s22, 0
      %p148 = por %p146, %p147
      %p149 = scmp.ne.s32.totalorder %s137, %s138
      %p150 = scmp.eq.s32.totalorder %s23, 1
      %p151 = por %p149, %p150
      %p153 = scmp.ne.s32.totalorder %s138, %s152
      %p154 = scmp.eq.s32.totalorder %s23, 0
      %p155 = por %p153, %p154
      %s157 = sadd.s32 %s156, 1
      %p160 = scmp.eq.s32.totalorder %s17, 1
      %p161 = scmp.ne.s32.totalorder %s156, %s158
      %p162 = scmp.eq.s32.totalorder %s17, 0
      %p163 = por %p161, %p162
      %p164 = scmp.ne.s32.totalorder %s156, %s158
      %p165 = scmp.eq.s32.totalorder %s22, 1
      %p166 = por %p164, %p165
      %p167 = scmp.ne.s32.totalorder %s158, %s159
      %p168 = scmp.eq.s32.totalorder %s22, 0
      %p169 = por %p167, %p168
      %p170 = scmp.ne.s32.totalorder %s158, %s159
      %p171 = scmp.eq.s32.totalorder %s23, 1
      %p172 = por %p170, %p171
      %p174 = scmp.ne.s32.totalorder %s159, %s173
      %p175 = scmp.eq.s32.totalorder %s23, 0
      %p176 = por %p174, %p175
      %s177 = ssub.s32 %s17, %s24
      %p178 = scmp.eq.s32.totalorder %s177, 0
      %s180 = sadd.s32 %s179, 1
      %s181 = scalar_select %p178, %s179, %s180
      %p184 = pneg %p178
      %p185 = scmp.eq.s32.totalorder %s17, 1
      %p186 = por %p184, %p185
      %p187 = scmp.ne.s32.totalorder %s179, %s182
      %p188 = scmp.eq.s32.totalorder %s17, 0
      %p189 = por %p187, %p188
      %p190 = scmp.ne.s32.totalorder %s179, %s182
      %p191 = scmp.eq.s32.totalorder %s22, 1
      %p192 = por %p190, %p191
      %p193 = scmp.ne.s32.totalorder %s182, %s183
      %p194 = scmp.eq.s32.totalorder %s22, 0
      %p195 = por %p193, %p194
      %p196 = scmp.ne.s32.totalorder %s182, %s183
      %p197 = scmp.eq.s32.totalorder %s23, 1
      %p198 = por %p196, %p197
      %p200 = scmp.ne.s32.totalorder %s183, %s199
      %p201 = scmp.eq.s32.totalorder %s23, 0
      %p202 = por %p200, %p201
      %p203 = scmp.le.s32.totalorder 1, %s17
      %p204 = scmp.lt.s32.totalorder %s17, 3
      %p205 = pnand %p203, %p204
      %p206 = pneg %p205
      // Predicated region
      $region9: #{tpu_custom_call.1} parent=5 // pred_check
        _
      $region10: #{tpu_custom_call.1} parent=5 // pred_check_branch
        %208 = sbr.rel (%p205) target = $region12
      $region11: #{tpu_custom_call.1} parent=5 // pred_region
        %s209 = ssub.s32 %s17, 1
        // Predicated region
        $region13: #{tpu_custom_call.1} parent=11 // pred_check
          %p210 = pneg %p64
        $region14: #{tpu_custom_call.1} parent=11 // pred_check_branch
          %212 = sbr.rel (%p210) target = $region16
        $region15: #{tpu_custom_call.1} parent=11 // pred_region
          _
        $region16: #{tpu_custom_call.1} parent=11 // pred_fallthru
          _
        // Predicated region
        $region17: #{tpu_custom_call.1} parent=11 // pred_check
          %p213 = pneg %p85
        $region18: #{tpu_custom_call.1} parent=11 // pred_check_branch
          %215 = sbr.rel (%p213) target = $region20
        $region19: #{tpu_custom_call.1} parent=11 // pred_region
          _
        $region20: #{tpu_custom_call.1} parent=11 // pred_fallthru
          _
        // Predicated region
        $region21: #{tpu_custom_call.1} parent=11 // pred_check
          %p216 = pneg %p106
        $region22: #{tpu_custom_call.1} parent=11 // pred_check_branch
          %218 = sbr.rel (%p216) target = $region24
        $region23: #{tpu_custom_call.1} parent=11 // pred_region
          _
        $region24: #{tpu_custom_call.1} parent=11 // pred_fallthru
          _
        // Predicated region
        $region25: #{tpu_custom_call.1} parent=11 // pred_check
          %p219 = pneg %p127
        $region26: #{tpu_custom_call.1} parent=11 // pred_check_branch
          %221 = sbr.rel (%p219) target = $region28
        $region27: #{tpu_custom_call.1} parent=11 // pred_region
          _
        $region28: #{tpu_custom_call.1} parent=11 // pred_fallthru
          _
        // Predicated region
        $region29: #{tpu_custom_call.1} parent=11 // pred_check
          %p222 = pneg %p148
        $region30: #{tpu_custom_call.1} parent=11 // pred_check_branch
          %224 = sbr.rel (%p222) target = $region32
        $region31: #{tpu_custom_call.1} parent=11 // pred_region
          _
        $region32: #{tpu_custom_call.1} parent=11 // pred_fallthru
          _
        // Predicated region
        $region33: #{tpu_custom_call.1} parent=11 // pred_check
          %p225 = pneg %p169
        $region34: #{tpu_custom_call.1} parent=11 // pred_check_branch
          %227 = sbr.rel (%p225) target = $region36
        $region35: #{tpu_custom_call.1} parent=11 // pred_region
          _
        $region36: #{tpu_custom_call.1} parent=11 // pred_fallthru
          _
      $region12: #{tpu_custom_call.1} parent=5 // pred_fallthru
        _
      %p228 = scmp.lt.s32.totalorder %s17, 2
      // Predicated region
      $region37: #{tpu_custom_call.1} parent=5 // pred_check
        %p229 = pneg %p228
      $region38: #{tpu_custom_call.1} parent=5 // pred_check_branch
        %231 = sbr.rel (%p229) target = $region40
      $region39: #{tpu_custom_call.1} parent=5 // pred_region
        // Predicated region
        $region41: #{tpu_custom_call.1} parent=39 // pred_check
          %p232 = pneg %p37
        $region42: #{tpu_custom_call.1} parent=39 // pred_check_branch
          %234 = sbr.rel (%p232) target = $region44
        $region43: #{tpu_custom_call.1} parent=39 // pred_region
          %s235 = smul.u32 2, %s17
          %p236 = scmp.lt.s32.totalorder %s235, 3
          %s237 = scalar_select %p236, %s235, 3
          %s238 = scalar_lea.vmem %s0, %s237
          %s239 = smul.u32 2, %s17
        $region44: #{tpu_custom_call.1} parent=39 // pred_fallthru
          _
      $region40: #{tpu_custom_call.1} parent=5 // pred_fallthru
        _
      %p240 = scmp.le.s32.totalorder 1, %s17
      %p241 = scmp.lt.s32.totalorder %s17, 3
      %p242 = pnand %p240, %p241
      %p243 = pneg %p242
      // Predicated region
      $region45: #{tpu_custom_call.1} parent=5 // pred_check
        _
      $region46: #{tpu_custom_call.1} parent=5 // pred_check_branch
        %245 = sbr.rel (%p242) target = $region48
      $region47: #{tpu_custom_call.1} parent=5 // pred_region
        %s246 = ssub.s32 %s17, 1
        %s247 = smul.u32 2, %s22
        %p248 = scmp.lt.s32.totalorder %s247, 3
        %s249 = scalar_select %p248, %s247, 3
        %s250 = scalar_lea.vmem %s0, %s249
        %p251 = pneg %p43
        %p252 = pneg %p40
        %p253 = pneg %p64
        %p254 = pneg %p61
        %p255 = pneg %p85
        %p256 = pneg %p82
        %p257 = pneg %p106
        %p258 = pneg %p103
        %p259 = pneg %p127
        %p260 = pneg %p124
        %p261 = pneg %p148
        %p262 = pneg %p145
        %p263 = pneg %p169
        %p264 = pneg %p166
        %p265 = pneg %p195
        %p266 = pneg %p192
        %s267 = sand.u32 %s182, 1
        %s268 = scalar_lea.sflag [#allocation4], %s267
        %s269 = sand.u32 %s182, 1
        %s270 = smul.addr %s269, 2
        %s271 = scalar_lea.vmem [#allocation3], %s270
        %s272 = smul.u32 2, %s22
        %p273 = scmp.lt.s32.totalorder %s272, 3
        %s274 = scalar_select %p273, %s272, 3
        %s275 = scalar_lea.vmem %s0, %s274
        %s276 = smul.u32 2, %s22
        %s277 = smul.u32 2, %s22
        %v278 = vld [vmem:[%s275] sm:$0x3]
        %v279 = vld [vmem:[%s1] sm:$0xff]
        %v280 = vld [vmem:[%s1 + $0x8] sm:$0xff]
        %v281 = vld [vmem:[%s1 + $0x10] sm:$0xff]
        %v282 = vld [vmem:[%s1 + $0x18] sm:$0xff]
        %v283 = vld [vmem:[%s1 + $0x20] sm:$0xff]
        %v284 = vld [vmem:[%s1 + $0x28] sm:$0xff]
        %v285 = vld [vmem:[%s1 + $0x30] sm:$0xff]
        %v286 = vld [vmem:[%s1 + $0x38] sm:$0xff]
        %v287 = vld [vmem:[%s1 + $0x40] sm:$0xff]
        %v288 = vld [vmem:[%s1 + $0x48] sm:$0xff]
        %v289 = vld [vmem:[%s1 + $0x50] sm:$0xff]
        %v290 = vld [vmem:[%s1 + $0x58] sm:$0xff]
        %v291 = vld [vmem:[%s1 + $0x60] sm:$0xff]
        %v292 = vld [vmem:[%s1 + $0x68] sm:$0xff]
        %v293 = vld [vmem:[%s1 + $0x70] sm:$0xff]
        %v294 = vld [vmem:[%s1 + $0x78] sm:$0xff]
        %v295 = vld [vmem:[%s1 + $0x80] sm:$0xff]
        %v296 = vld [vmem:[%s1 + $0x88] sm:$0xff]
        %v297 = vld [vmem:[%s1 + $0x90] sm:$0xff]
        %v298 = vld [vmem:[%s1 + $0x98] sm:$0xff]
        %v299 = vld [vmem:[%s1 + $0xa0] sm:$0xff]
        %v300 = vld [vmem:[%s1 + $0xa8] sm:$0xff]
        %v301 = vld [vmem:[%s1 + $0xb0] sm:$0xff]
        %v302 = vld [vmem:[%s1 + $0xb8] sm:$0xff]
        %v303 = vld [vmem:[%s1 + $0xc0] sm:$0xff]
        %v304 = vld [vmem:[%s1 + $0xc8] sm:$0xff]
        %v305 = vld [vmem:[%s1 + $0xd0] sm:$0xff]
        %v306 = vld [vmem:[%s1 + $0xd8] sm:$0xff]
        %v307 = vld [vmem:[%s1 + $0xe0] sm:$0xff]
        %v308 = vld [vmem:[%s1 + $0xe8] sm:$0xff]
        %v309 = vld [vmem:[%s1 + $0xf0] sm:$0xff]
        %v310 = vld [vmem:[%s1 + $0xf8] sm:$0xff]
        %v311 = vld [vmem:[%s1 + $0x100] sm:$0xff]
        %v312 = vld [vmem:[%s1 + $0x108] sm:$0xff]
        %v313 = vld [vmem:[%s1 + $0x110] sm:$0xff]
        %v314 = vld [vmem:[%s1 + $0x118] sm:$0xff]
        %v315 = vld [vmem:[%s1 + $0x120] sm:$0xff]
        %v316 = vld [vmem:[%s1 + $0x128] sm:$0xff]
        %v317 = vld [vmem:[%s1 + $0x130] sm:$0xff]
        %v318 = vld [vmem:[%s1 + $0x138] sm:$0xff]
        %v319 = vld [vmem:[%s1 + $0x140] sm:$0xff]
        %v320 = vld [vmem:[%s1 + $0x148] sm:$0xff]
        %v321 = vld [vmem:[%s1 + $0x150] sm:$0xff]
        %v322 = vld [vmem:[%s1 + $0x158] sm:$0xff]
        %v323 = vld [vmem:[%s1 + $0x160] sm:$0xff]
        %v324 = vld [vmem:[%s1 + $0x168] sm:$0xff]
        %v325 = vld [vmem:[%s1 + $0x170] sm:$0xff]
        %v326 = vld [vmem:[%s1 + $0x178] sm:$0xff]
        %v327 = vld [vmem:[%s1 + $0x180] sm:$0xff]
        %v328 = vld [vmem:[%s1 + $0x188] sm:$0xff]
        %v329 = vld [vmem:[%s1 + $0x190] sm:$0xff]
        %v330 = vld [vmem:[%s1 + $0x198] sm:$0xff]
        %v331 = vld [vmem:[%s1 + $0x1a0] sm:$0xff]
        %v332 = vld [vmem:[%s1 + $0x1a8] sm:$0xff]
        %v333 = vld [vmem:[%s1 + $0x1b0] sm:$0xff]
        %v334 = vld [vmem:[%s1 + $0x1b8] sm:$0xff]
        %v335 = vld [vmem:[%s1 + $0x1c0] sm:$0xff]
        %v336 = vld [vmem:[%s1 + $0x1c8] sm:$0xff]
        %v337 = vld [vmem:[%s1 + $0x1d0] sm:$0xff]
        %v338 = vld [vmem:[%s1 + $0x1d8] sm:$0xff]
        %v339 = vld [vmem:[%s1 + $0x1e0] sm:$0xff]
        %v340 = vld [vmem:[%s1 + $0x1e8] sm:$0xff]
        %v341 = vld [vmem:[%s1 + $0x1f0] sm:$0xff]
        %v342 = vld [vmem:[%s1 + $0x1f8] sm:$0xff]
        %344 = vset.pattern.permute.xlu0 0
        %345 = vperm.xlu0 %344, %v279
        %v346 = vpop.permute.xlu0 %345
        %349 = vset.pattern.permute.xlu0 0
        %350 = vperm.xlu0 %349, %v280
        %v351 = vpop.permute.xlu0 %350
        %354 = vset.pattern.permute.xlu0 0
        %355 = vperm.xlu0 %354, %v281
        %v356 = vpop.permute.xlu0 %355
        %359 = vset.pattern.permute.xlu0 0
        %360 = vperm.xlu0 %359, %v282
        %v361 = vpop.permute.xlu0 %360
        %364 = vset.pattern.permute.xlu0 0
        %365 = vperm.xlu0 %364, %v283
        %v366 = vpop.permute.xlu0 %365
        %369 = vset.pattern.permute.xlu0 0
        %370 = vperm.xlu0 %369, %v284
        %v371 = vpop.permute.xlu0 %370
        %374 = vset.pattern.permute.xlu0 0
        %375 = vperm.xlu0 %374, %v285
        %v376 = vpop.permute.xlu0 %375
        %379 = vset.pattern.permute.xlu0 0
        %380 = vperm.xlu0 %379, %v286
        %v381 = vpop.permute.xlu0 %380
        %384 = vset.pattern.permute.xlu0 0
        %385 = vperm.xlu0 %384, %v287
        %v386 = vpop.permute.xlu0 %385
        %389 = vset.pattern.permute.xlu0 0
        %390 = vperm.xlu0 %389, %v288
        %v391 = vpop.permute.xlu0 %390
        %394 = vset.pattern.permute.xlu0 0
        %395 = vperm.xlu0 %394, %v289
        %v396 = vpop.permute.xlu0 %395
        %399 = vset.pattern.permute.xlu0 0
        %400 = vperm.xlu0 %399, %v290
        %v401 = vpop.permute.xlu0 %400
        %404 = vset.pattern.permute.xlu0 0
        %405 = vperm.xlu0 %404, %v291
        %v406 = vpop.permute.xlu0 %405
        %409 = vset.pattern.permute.xlu0 0
        %410 = vperm.xlu0 %409, %v292
        %v411 = vpop.permute.xlu0 %410
        %414 = vset.pattern.permute.xlu0 0
        %415 = vperm.xlu0 %414, %v293
        %v416 = vpop.permute.xlu0 %415
        %419 = vset.pattern.permute.xlu0 0
        %420 = vperm.xlu0 %419, %v294
        %v421 = vpop.permute.xlu0 %420
        %424 = vset.pattern.permute.xlu0 0
        %425 = vperm.xlu0 %424, %v295
        %v426 = vpop.permute.xlu0 %425
        %429 = vset.pattern.permute.xlu0 0
        %430 = vperm.xlu0 %429, %v296
        %v431 = vpop.permute.xlu0 %430
        %434 = vset.pattern.permute.xlu0 0
        %435 = vperm.xlu0 %434, %v297
        %v436 = vpop.permute.xlu0 %435
        %439 = vset.pattern.permute.xlu0 0
        %440 = vperm.xlu0 %439, %v298
        %v441 = vpop.permute.xlu0 %440
        %444 = vset.pattern.permute.xlu0 0
        %445 = vperm.xlu0 %444, %v299
        %v446 = vpop.permute.xlu0 %445
        %449 = vset.pattern.permute.xlu0 0
        %450 = vperm.xlu0 %449, %v300
        %v451 = vpop.permute.xlu0 %450
        %454 = vset.pattern.permute.xlu0 0
        %455 = vperm.xlu0 %454, %v301
        %v456 = vpop.permute.xlu0 %455
        %459 = vset.pattern.permute.xlu0 0
        %460 = vperm.xlu0 %459, %v302
        %v461 = vpop.permute.xlu0 %460
        %464 = vset.pattern.permute.xlu0 0
        %465 = vperm.xlu0 %464, %v303
        %v466 = vpop.permute.xlu0 %465
        %469 = vset.pattern.permute.xlu0 0
        %470 = vperm.xlu0 %469, %v304
        %v471 = vpop.permute.xlu0 %470
        %474 = vset.pattern.permute.xlu0 0
        %475 = vperm.xlu0 %474, %v305
        %v476 = vpop.permute.xlu0 %475
        %479 = vset.pattern.permute.xlu0 0
        %480 = vperm.xlu0 %479, %v306
        %v481 = vpop.permute.xlu0 %480
        %484 = vset.pattern.permute.xlu0 0
        %485 = vperm.xlu0 %484, %v307
        %v486 = vpop.permute.xlu0 %485
        %489 = vset.pattern.permute.xlu0 0
        %490 = vperm.xlu0 %489, %v308
        %v491 = vpop.permute.xlu0 %490
        %494 = vset.pattern.permute.xlu0 0
        %495 = vperm.xlu0 %494, %v309
        %v496 = vpop.permute.xlu0 %495
        %499 = vset.pattern.permute.xlu0 0
        %500 = vperm.xlu0 %499, %v310
        %v501 = vpop.permute.xlu0 %500
        %504 = vset.pattern.permute.xlu0 0
        %505 = vperm.xlu0 %504, %v311
        %v506 = vpop.permute.xlu0 %505
        %509 = vset.pattern.permute.xlu0 0
        %510 = vperm.xlu0 %509, %v312
        %v511 = vpop.permute.xlu0 %510
        %514 = vset.pattern.permute.xlu0 0
        %515 = vperm.xlu0 %514, %v313
        %v516 = vpop.permute.xlu0 %515
        %519 = vset.pattern.permute.xlu0 0
        %520 = vperm.xlu0 %519, %v314
        %v521 = vpop.permute.xlu0 %520
        %524 = vset.pattern.permute.xlu0 0
        %525 = vperm.xlu0 %524, %v315
        %v526 = vpop.permute.xlu0 %525
        %529 = vset.pattern.permute.xlu0 0
        %530 = vperm.xlu0 %529, %v316
        %v531 = vpop.permute.xlu0 %530
        %534 = vset.pattern.permute.xlu0 0
        %535 = vperm.xlu0 %534, %v317
        %v536 = vpop.permute.xlu0 %535
        %539 = vset.pattern.permute.xlu0 0
        %540 = vperm.xlu0 %539, %v318
        %v541 = vpop.permute.xlu0 %540
        %544 = vset.pattern.permute.xlu0 0
        %545 = vperm.xlu0 %544, %v319
        %v546 = vpop.permute.xlu0 %545
        %549 = vset.pattern.permute.xlu0 0
        %550 = vperm.xlu0 %549, %v320
        %v551 = vpop.permute.xlu0 %550
        %554 = vset.pattern.permute.xlu0 0
        %555 = vperm.xlu0 %554, %v321
        %v556 = vpop.permute.xlu0 %555
        %559 = vset.pattern.permute.xlu0 0
        %560 = vperm.xlu0 %559, %v322
        %v561 = vpop.permute.xlu0 %560
        %564 = vset.pattern.permute.xlu0 0
        %565 = vperm.xlu0 %564, %v323
        %v566 = vpop.permute.xlu0 %565
        %569 = vset.pattern.permute.xlu0 0
        %570 = vperm.xlu0 %569, %v324
        %v571 = vpop.permute.xlu0 %570
        %574 = vset.pattern.permute.xlu0 0
        %575 = vperm.xlu0 %574, %v325
        %v576 = vpop.permute.xlu0 %575
        %579 = vset.pattern.permute.xlu0 0
        %580 = vperm.xlu0 %579, %v326
        %v581 = vpop.permute.xlu0 %580
        %584 = vset.pattern.permute.xlu0 0
        %585 = vperm.xlu0 %584, %v327
        %v586 = vpop.permute.xlu0 %585
        %589 = vset.pattern.permute.xlu0 0
        %590 = vperm.xlu0 %589, %v328
        %v591 = vpop.permute.xlu0 %590
        %594 = vset.pattern.permute.xlu0 0
        %595 = vperm.xlu0 %594, %v329
        %v596 = vpop.permute.xlu0 %595
        %599 = vset.pattern.permute.xlu0 0
        %600 = vperm.xlu0 %599, %v330
        %v601 = vpop.permute.xlu0 %600
        %604 = vset.pattern.permute.xlu0 0
        %605 = vperm.xlu0 %604, %v331
        %v606 = vpop.permute.xlu0 %605
        %609 = vset.pattern.permute.xlu0 0
        %610 = vperm.xlu0 %609, %v332
        %v611 = vpop.permute.xlu0 %610
        %614 = vset.pattern.permute.xlu0 0
        %615 = vperm.xlu0 %614, %v333
        %v616 = vpop.permute.xlu0 %615
        %619 = vset.pattern.permute.xlu0 0
        %620 = vperm.xlu0 %619, %v334
        %v621 = vpop.permute.xlu0 %620
        %624 = vset.pattern.permute.xlu0 0
        %625 = vperm.xlu0 %624, %v335
        %v626 = vpop.permute.xlu0 %625
        %629 = vset.pattern.permute.xlu0 0
        %630 = vperm.xlu0 %629, %v336
        %v631 = vpop.permute.xlu0 %630
        %634 = vset.pattern.permute.xlu0 0
        %635 = vperm.xlu0 %634, %v337
        %v636 = vpop.permute.xlu0 %635
        %639 = vset.pattern.permute.xlu0 0
        %640 = vperm.xlu0 %639, %v338
        %v641 = vpop.permute.xlu0 %640
        %644 = vset.pattern.permute.xlu0 0
        %645 = vperm.xlu0 %644, %v339
        %v646 = vpop.permute.xlu0 %645
        %649 = vset.pattern.permute.xlu0 0
        %650 = vperm.xlu0 %649, %v340
        %v651 = vpop.permute.xlu0 %650
        %654 = vset.pattern.permute.xlu0 0
        %655 = vperm.xlu0 %654, %v341
        %v656 = vpop.permute.xlu0 %655
        %659 = vset.pattern.permute.xlu0 0
        %660 = vperm.xlu0 %659, %v342
        %v661 = vpop.permute.xlu0 %660
        %v664 = vperm.slane %v278, 0
        %v665 = vperm.slane %v278, 1
        %v668 = vmul.f32 %v346, %v664
        %v669 = vmul.f32 %v346, %v665
        %v670 = vmul.f32 %v351, %v664
        %v671 = vmul.f32 %v351, %v665
        %v672 = vmul.f32 %v356, %v664
        %v673 = vmul.f32 %v356, %v665
        %v674 = vmul.f32 %v361, %v664
        %v675 = vmul.f32 %v361, %v665
        %v676 = vmul.f32 %v366, %v664
        %v677 = vmul.f32 %v366, %v665
        %v678 = vmul.f32 %v371, %v664
        %v679 = vmul.f32 %v371, %v665
        %v680 = vmul.f32 %v376, %v664
        %v681 = vmul.f32 %v376, %v665
        %v682 = vmul.f32 %v381, %v664
        %v683 = vmul.f32 %v381, %v665
        %v684 = vmul.f32 %v386, %v664
        %v685 = vmul.f32 %v386, %v665
        %v686 = vmul.f32 %v391, %v664
        %v687 = vmul.f32 %v391, %v665
        %v688 = vmul.f32 %v396, %v664
        %v689 = vmul.f32 %v396, %v665
        %v690 = vmul.f32 %v401, %v664
        %v691 = vmul.f32 %v401, %v665
        %v692 = vmul.f32 %v406, %v664
        %v693 = vmul.f32 %v406, %v665
        %v694 = vmul.f32 %v411, %v664
        %v695 = vmul.f32 %v411, %v665
        %v696 = vmul.f32 %v416, %v664
        %v697 = vmul.f32 %v416, %v665
        %v698 = vmul.f32 %v421, %v664
        %v699 = vmul.f32 %v421, %v665
        %v700 = vmul.f32 %v426, %v664
        %v701 = vmul.f32 %v426, %v665
        %v702 = vmul.f32 %v431, %v664
        %v703 = vmul.f32 %v431, %v665
        %v704 = vmul.f32 %v436, %v664
        %v705 = vmul.f32 %v436, %v665
        %v706 = vmul.f32 %v441, %v664
        %v707 = vmul.f32 %v441, %v665
        %v708 = vmul.f32 %v446, %v664
        %v709 = vmul.f32 %v446, %v665
        %v710 = vmul.f32 %v451, %v664
        %v711 = vmul.f32 %v451, %v665
        %v712 = vmul.f32 %v456, %v664
        %v713 = vmul.f32 %v456, %v665
        %v714 = vmul.f32 %v461, %v664
        %v715 = vmul.f32 %v461, %v665
        %v716 = vmul.f32 %v466, %v664
        %v717 = vmul.f32 %v466, %v665
        %v718 = vmul.f32 %v471, %v664
        %v719 = vmul.f32 %v471, %v665
        %v720 = vmul.f32 %v476, %v664
        %v721 = vmul.f32 %v476, %v665
        %v722 = vmul.f32 %v481, %v664
        %v723 = vmul.f32 %v481, %v665
        %v724 = vmul.f32 %v486, %v664
        %v725 = vmul.f32 %v486, %v665
        %v726 = vmul.f32 %v491, %v664
        %v727 = vmul.f32 %v491, %v665
        %v728 = vmul.f32 %v496, %v664
        %v729 = vmul.f32 %v496, %v665
        %v730 = vmul.f32 %v501, %v664
        %v731 = vmul.f32 %v501, %v665
        %v732 = vmul.f32 %v506, %v664
        %v733 = vmul.f32 %v506, %v665
        %v734 = vmul.f32 %v511, %v664
        %v735 = vmul.f32 %v511, %v665
        %v736 = vmul.f32 %v516, %v664
        %v737 = vmul.f32 %v516, %v665
        %v738 = vmul.f32 %v521, %v664
        %v739 = vmul.f32 %v521, %v665
        %v740 = vmul.f32 %v526, %v664
        %v741 = vmul.f32 %v526, %v665
        %v742 = vmul.f32 %v531, %v664
        %v743 = vmul.f32 %v531, %v665
        %v744 = vmul.f32 %v536, %v664
        %v745 = vmul.f32 %v536, %v665
        %v746 = vmul.f32 %v541, %v664
        %v747 = vmul.f32 %v541, %v665
        %v748 = vmul.f32 %v546, %v664
        %v749 = vmul.f32 %v546, %v665
        %v750 = vmul.f32 %v551, %v664
        %v751 = vmul.f32 %v551, %v665
        %v752 = vmul.f32 %v556, %v664
        %v753 = vmul.f32 %v556, %v665
        %v754 = vmul.f32 %v561, %v664
        %v755 = vmul.f32 %v561, %v665
        %v756 = vmul.f32 %v566, %v664
        %v757 = vmul.f32 %v566, %v665
        %v758 = vmul.f32 %v571, %v664
        %v759 = vmul.f32 %v571, %v665
        %v760 = vmul.f32 %v576, %v664
        %v761 = vmul.f32 %v576, %v665
        %v762 = vmul.f32 %v581, %v664
        %v763 = vmul.f32 %v581, %v665
        %v764 = vmul.f32 %v586, %v664
        %v765 = vmul.f32 %v586, %v665
        %v766 = vmul.f32 %v591, %v664
        %v767 = vmul.f32 %v591, %v665
        %v768 = vmul.f32 %v596, %v664
        %v769 = vmul.f32 %v596, %v665
        %v770 = vmul.f32 %v601, %v664
        %v771 = vmul.f32 %v601, %v665
        %v772 = vmul.f32 %v606, %v664
        %v773 = vmul.f32 %v606, %v665
        %v774 = vmul.f32 %v611, %v664
        %v775 = vmul.f32 %v611, %v665
        %v776 = vmul.f32 %v616, %v664
        %v777 = vmul.f32 %v616, %v665
        %v778 = vmul.f32 %v621, %v664
        %v779 = vmul.f32 %v621, %v665
        %v780 = vmul.f32 %v626, %v664
        %v781 = vmul.f32 %v626, %v665
        %v782 = vmul.f32 %v631, %v664
        %v783 = vmul.f32 %v631, %v665
        %v784 = vmul.f32 %v636, %v664
        %v785 = vmul.f32 %v636, %v665
        %v786 = vmul.f32 %v641, %v664
        %v787 = vmul.f32 %v641, %v665
        %v788 = vmul.f32 %v646, %v664
        %v789 = vmul.f32 %v646, %v665
        %v790 = vmul.f32 %v651, %v664
        %v791 = vmul.f32 %v651, %v665
        %v792 = vmul.f32 %v656, %v664
        %v793 = vmul.f32 %v656, %v665
        %v794 = vmul.f32 %v661, %v664
        %v795 = vmul.f32 %v661, %v665
        %v796 = vld [vmem:[%s2] sm:$0xff]
        %v797 = vld [vmem:[%s2 + $0x8] sm:$0xff]
        %v798 = vld [vmem:[%s2 + $0x10] sm:$0xff]
        %v799 = vld [vmem:[%s2 + $0x18] sm:$0xff]
        %v800 = vld [vmem:[%s2 + $0x20] sm:$0xff]
        %v801 = vld [vmem:[%s2 + $0x28] sm:$0xff]
        %v802 = vld [vmem:[%s2 + $0x30] sm:$0xff]
        %v803 = vld [vmem:[%s2 + $0x38] sm:$0xff]
        %v804 = vld [vmem:[%s2 + $0x40] sm:$0xff]
        %v805 = vld [vmem:[%s2 + $0x48] sm:$0xff]
        %v806 = vld [vmem:[%s2 + $0x50] sm:$0xff]
        %v807 = vld [vmem:[%s2 + $0x58] sm:$0xff]
        %v808 = vld [vmem:[%s2 + $0x60] sm:$0xff]
        %v809 = vld [vmem:[%s2 + $0x68] sm:$0xff]
        %v810 = vld [vmem:[%s2 + $0x70] sm:$0xff]
        %v811 = vld [vmem:[%s2 + $0x78] sm:$0xff]
        %v812 = vld [vmem:[%s2 + $0x80] sm:$0xff]
        %v813 = vld [vmem:[%s2 + $0x88] sm:$0xff]
        %v814 = vld [vmem:[%s2 + $0x90] sm:$0xff]
        %v815 = vld [vmem:[%s2 + $0x98] sm:$0xff]
        %v816 = vld [vmem:[%s2 + $0xa0] sm:$0xff]
        %v817 = vld [vmem:[%s2 + $0xa8] sm:$0xff]
        %v818 = vld [vmem:[%s2 + $0xb0] sm:$0xff]
        %v819 = vld [vmem:[%s2 + $0xb8] sm:$0xff]
        %v820 = vld [vmem:[%s2 + $0xc0] sm:$0xff]
        %v821 = vld [vmem:[%s2 + $0xc8] sm:$0xff]
        %v822 = vld [vmem:[%s2 + $0xd0] sm:$0xff]
        %v823 = vld [vmem:[%s2 + $0xd8] sm:$0xff]
        %v824 = vld [vmem:[%s2 + $0xe0] sm:$0xff]
        %v825 = vld [vmem:[%s2 + $0xe8] sm:$0xff]
        %v826 = vld [vmem:[%s2 + $0xf0] sm:$0xff]
        %v827 = vld [vmem:[%s2 + $0xf8] sm:$0xff]
        %v828 = vld [vmem:[%s2 + $0x100] sm:$0xff]
        %v829 = vld [vmem:[%s2 + $0x108] sm:$0xff]
        %v830 = vld [vmem:[%s2 + $0x110] sm:$0xff]
        %v831 = vld [vmem:[%s2 + $0x118] sm:$0xff]
        %v832 = vld [vmem:[%s2 + $0x120] sm:$0xff]
        %v833 = vld [vmem:[%s2 + $0x128] sm:$0xff]
        %v834 = vld [vmem:[%s2 + $0x130] sm:$0xff]
        %v835 = vld [vmem:[%s2 + $0x138] sm:$0xff]
        %v836 = vld [vmem:[%s2 + $0x140] sm:$0xff]
        %v837 = vld [vmem:[%s2 + $0x148] sm:$0xff]
        %v838 = vld [vmem:[%s2 + $0x150] sm:$0xff]
        %v839 = vld [vmem:[%s2 + $0x158] sm:$0xff]
        %v840 = vld [vmem:[%s2 + $0x160] sm:$0xff]
        %v841 = vld [vmem:[%s2 + $0x168] sm:$0xff]
        %v842 = vld [vmem:[%s2 + $0x170] sm:$0xff]
        %v843 = vld [vmem:[%s2 + $0x178] sm:$0xff]
        %v844 = vld [vmem:[%s2 + $0x180] sm:$0xff]
        %v845 = vld [vmem:[%s2 + $0x188] sm:$0xff]
        %v846 = vld [vmem:[%s2 + $0x190] sm:$0xff]
        %v847 = vld [vmem:[%s2 + $0x198] sm:$0xff]
        %v848 = vld [vmem:[%s2 + $0x1a0] sm:$0xff]
        %v849 = vld [vmem:[%s2 + $0x1a8] sm:$0xff]
        %v850 = vld [vmem:[%s2 + $0x1b0] sm:$0xff]
        %v851 = vld [vmem:[%s2 + $0x1b8] sm:$0xff]
        %v852 = vld [vmem:[%s2 + $0x1c0] sm:$0xff]
        %v853 = vld [vmem:[%s2 + $0x1c8] sm:$0xff]
        %v854 = vld [vmem:[%s2 + $0x1d0] sm:$0xff]
        %v855 = vld [vmem:[%s2 + $0x1d8] sm:$0xff]
        %v856 = vld [vmem:[%s2 + $0x1e0] sm:$0xff]
        %v857 = vld [vmem:[%s2 + $0x1e8] sm:$0xff]
        %v858 = vld [vmem:[%s2 + $0x1f0] sm:$0xff]
        %v859 = vld [vmem:[%s2 + $0x1f8] sm:$0xff]
        %861 = vset.pattern.permute.xlu0 0
        %862 = vperm.xlu0 %861, %v796
        %v863 = vpop.permute.xlu0 %862
        %866 = vset.pattern.permute.xlu0 0
        %867 = vperm.xlu0 %866, %v797
        %v868 = vpop.permute.xlu0 %867
        %871 = vset.pattern.permute.xlu0 0
        %872 = vperm.xlu0 %871, %v798
        %v873 = vpop.permute.xlu0 %872
        %876 = vset.pattern.permute.xlu0 0
        %877 = vperm.xlu0 %876, %v799
        %v878 = vpop.permute.xlu0 %877
        %881 = vset.pattern.permute.xlu0 0
        %882 = vperm.xlu0 %881, %v800
        %v883 = vpop.permute.xlu0 %882
        %886 = vset.pattern.permute.xlu0 0
        %887 = vperm.xlu0 %886, %v801
        %v888 = vpop.permute.xlu0 %887
        %891 = vset.pattern.permute.xlu0 0
        %892 = vperm.xlu0 %891, %v802
        %v893 = vpop.permute.xlu0 %892
        %896 = vset.pattern.permute.xlu0 0
        %897 = vperm.xlu0 %896, %v803
        %v898 = vpop.permute.xlu0 %897
        %901 = vset.pattern.permute.xlu0 0
        %902 = vperm.xlu0 %901, %v804
        %v903 = vpop.permute.xlu0 %902
        %906 = vset.pattern.permute.xlu0 0
        %907 = vperm.xlu0 %906, %v805
        %v908 = vpop.permute.xlu0 %907
        %911 = vset.pattern.permute.xlu0 0
        %912 = vperm.xlu0 %911, %v806
        %v913 = vpop.permute.xlu0 %912
        %916 = vset.pattern.permute.xlu0 0
        %917 = vperm.xlu0 %916, %v807
        %v918 = vpop.permute.xlu0 %917
        %921 = vset.pattern.permute.xlu0 0
        %922 = vperm.xlu0 %921, %v808
        %v923 = vpop.permute.xlu0 %922
        %926 = vset.pattern.permute.xlu0 0
        %927 = vperm.xlu0 %926, %v809
        %v928 = vpop.permute.xlu0 %927
        %931 = vset.pattern.permute.xlu0 0
        %932 = vperm.xlu0 %931, %v810
        %v933 = vpop.permute.xlu0 %932
        %936 = vset.pattern.permute.xlu0 0
        %937 = vperm.xlu0 %936, %v811
        %v938 = vpop.permute.xlu0 %937
        %941 = vset.pattern.permute.xlu0 0
        %942 = vperm.xlu0 %941, %v812
        %v943 = vpop.permute.xlu0 %942
        %946 = vset.pattern.permute.xlu0 0
        %947 = vperm.xlu0 %946, %v813
        %v948 = vpop.permute.xlu0 %947
        %951 = vset.pattern.permute.xlu0 0
        %952 = vperm.xlu0 %951, %v814
        %v953 = vpop.permute.xlu0 %952
        %956 = vset.pattern.permute.xlu0 0
        %957 = vperm.xlu0 %956, %v815
        %v958 = vpop.permute.xlu0 %957
        %961 = vset.pattern.permute.xlu0 0
        %962 = vperm.xlu0 %961, %v816
        %v963 = vpop.permute.xlu0 %962
        %966 = vset.pattern.permute.xlu0 0
        %967 = vperm.xlu0 %966, %v817
        %v968 = vpop.permute.xlu0 %967
        %971 = vset.pattern.permute.xlu0 0
        %972 = vperm.xlu0 %971, %v818
        %v973 = vpop.permute.xlu0 %972
        %976 = vset.pattern.permute.xlu0 0
        %977 = vperm.xlu0 %976, %v819
        %v978 = vpop.permute.xlu0 %977
        %981 = vset.pattern.permute.xlu0 0
        %982 = vperm.xlu0 %981, %v820
        %v983 = vpop.permute.xlu0 %982
        %986 = vset.pattern.permute.xlu0 0
        %987 = vperm.xlu0 %986, %v821
        %v988 = vpop.permute.xlu0 %987
        %991 = vset.pattern.permute.xlu0 0
        %992 = vperm.xlu0 %991, %v822
        %v993 = vpop.permute.xlu0 %992
        %996 = vset.pattern.permute.xlu0 0
        %997 = vperm.xlu0 %996, %v823
        %v998 = vpop.permute.xlu0 %997
        %1001 = vset.pattern.permute.xlu0 0
        %1002 = vperm.xlu0 %1001, %v824
        %v1003 = vpop.permute.xlu0 %1002
        %1006 = vset.pattern.permute.xlu0 0
        %1007 = vperm.xlu0 %1006, %v825
        %v1008 = vpop.permute.xlu0 %1007
        %1011 = vset.pattern.permute.xlu0 0
        %1012 = vperm.xlu0 %1011, %v826
        %v1013 = vpop.permute.xlu0 %1012
        %1016 = vset.pattern.permute.xlu0 0
        %1017 = vperm.xlu0 %1016, %v827
        %v1018 = vpop.permute.xlu0 %1017
        %1021 = vset.pattern.permute.xlu0 0
        %1022 = vperm.xlu0 %1021, %v828
        %v1023 = vpop.permute.xlu0 %1022
        %1026 = vset.pattern.permute.xlu0 0
        %1027 = vperm.xlu0 %1026, %v829
        %v1028 = vpop.permute.xlu0 %1027
        %1031 = vset.pattern.permute.xlu0 0
        %1032 = vperm.xlu0 %1031, %v830
        %v1033 = vpop.permute.xlu0 %1032
        %1036 = vset.pattern.permute.xlu0 0
        %1037 = vperm.xlu0 %1036, %v831
        %v1038 = vpop.permute.xlu0 %1037
        %1041 = vset.pattern.permute.xlu0 0
        %1042 = vperm.xlu0 %1041, %v832
        %v1043 = vpop.permute.xlu0 %1042
        %1046 = vset.pattern.permute.xlu0 0
        %1047 = vperm.xlu0 %1046, %v833
        %v1048 = vpop.permute.xlu0 %1047
        %1051 = vset.pattern.permute.xlu0 0
        %1052 = vperm.xlu0 %1051, %v834
        %v1053 = vpop.permute.xlu0 %1052
        %1056 = vset.pattern.permute.xlu0 0
        %1057 = vperm.xlu0 %1056, %v835
        %v1058 = vpop.permute.xlu0 %1057
        %1061 = vset.pattern.permute.xlu0 0
        %1062 = vperm.xlu0 %1061, %v836
        %v1063 = vpop.permute.xlu0 %1062
        %1066 = vset.pattern.permute.xlu0 0
        %1067 = vperm.xlu0 %1066, %v837
        %v1068 = vpop.permute.xlu0 %1067
        %1071 = vset.pattern.permute.xlu0 0
        %1072 = vperm.xlu0 %1071, %v838
        %v1073 = vpop.permute.xlu0 %1072
        %1076 = vset.pattern.permute.xlu0 0
        %1077 = vperm.xlu0 %1076, %v839
        %v1078 = vpop.permute.xlu0 %1077
        %1081 = vset.pattern.permute.xlu0 0
        %1082 = vperm.xlu0 %1081, %v840
        %v1083 = vpop.permute.xlu0 %1082
        %1086 = vset.pattern.permute.xlu0 0
        %1087 = vperm.xlu0 %1086, %v841
        %v1088 = vpop.permute.xlu0 %1087
        %1091 = vset.pattern.permute.xlu0 0
        %1092 = vperm.xlu0 %1091, %v842
        %v1093 = vpop.permute.xlu0 %1092
        %1096 = vset.pattern.permute.xlu0 0
        %1097 = vperm.xlu0 %1096, %v843
        %v1098 = vpop.permute.xlu0 %1097
        %1101 = vset.pattern.permute.xlu0 0
        %1102 = vperm.xlu0 %1101, %v844
        %v1103 = vpop.permute.xlu0 %1102
        %1106 = vset.pattern.permute.xlu0 0
        %1107 = vperm.xlu0 %1106, %v845
        %v1108 = vpop.permute.xlu0 %1107
        %1111 = vset.pattern.permute.xlu0 0
        %1112 = vperm.xlu0 %1111, %v846
        %v1113 = vpop.permute.xlu0 %1112
        %1116 = vset.pattern.permute.xlu0 0
        %1117 = vperm.xlu0 %1116, %v847
        %v1118 = vpop.permute.xlu0 %1117
        %1121 = vset.pattern.permute.xlu0 0
        %1122 = vperm.xlu0 %1121, %v848
        %v1123 = vpop.permute.xlu0 %1122
        %1126 = vset.pattern.permute.xlu0 0
        %1127 = vperm.xlu0 %1126, %v849
        %v1128 = vpop.permute.xlu0 %1127
        %1131 = vset.pattern.permute.xlu0 0
        %1132 = vperm.xlu0 %1131, %v850
        %v1133 = vpop.permute.xlu0 %1132
        %1136 = vset.pattern.permute.xlu0 0
        %1137 = vperm.xlu0 %1136, %v851
        %v1138 = vpop.permute.xlu0 %1137
        %1141 = vset.pattern.permute.xlu0 0
        %1142 = vperm.xlu0 %1141, %v852
        %v1143 = vpop.permute.xlu0 %1142
        %1146 = vset.pattern.permute.xlu0 0
        %1147 = vperm.xlu0 %1146, %v853
        %v1148 = vpop.permute.xlu0 %1147
        %1151 = vset.pattern.permute.xlu0 0
        %1152 = vperm.xlu0 %1151, %v854
        %v1153 = vpop.permute.xlu0 %1152
        %1156 = vset.pattern.permute.xlu0 0
        %1157 = vperm.xlu0 %1156, %v855
        %v1158 = vpop.permute.xlu0 %1157
        %1161 = vset.pattern.permute.xlu0 0
        %1162 = vperm.xlu0 %1161, %v856
        %v1163 = vpop.permute.xlu0 %1162
        %1166 = vset.pattern.permute.xlu0 0
        %1167 = vperm.xlu0 %1166, %v857
        %v1168 = vpop.permute.xlu0 %1167
        %1171 = vset.pattern.permute.xlu0 0
        %1172 = vperm.xlu0 %1171, %v858
        %v1173 = vpop.permute.xlu0 %1172
        %1176 = vset.pattern.permute.xlu0 0
        %1177 = vperm.xlu0 %1176, %v859
        %v1178 = vpop.permute.xlu0 %1177
        %v1180 = vadd.f32 %v668, %v863
        %v1181 = vadd.f32 %v669, %v863
        %v1182 = vadd.f32 %v670, %v868
        %v1183 = vadd.f32 %v671, %v868
        %v1184 = vadd.f32 %v672, %v873
        %v1185 = vadd.f32 %v673, %v873
        %v1186 = vadd.f32 %v674, %v878
        %v1187 = vadd.f32 %v675, %v878
        %v1188 = vadd.f32 %v676, %v883
        %v1189 = vadd.f32 %v677, %v883
        %v1190 = vadd.f32 %v678, %v888
        %v1191 = vadd.f32 %v679, %v888
        %v1192 = vadd.f32 %v680, %v893
        %v1193 = vadd.f32 %v681, %v893
        %v1194 = vadd.f32 %v682, %v898
        %v1195 = vadd.f32 %v683, %v898
        %v1196 = vadd.f32 %v684, %v903
        %v1197 = vadd.f32 %v685, %v903
        %v1198 = vadd.f32 %v686, %v908
        %v1199 = vadd.f32 %v687, %v908
        %v1200 = vadd.f32 %v688, %v913
        %v1201 = vadd.f32 %v689, %v913
        %v1202 = vadd.f32 %v690, %v918
        %v1203 = vadd.f32 %v691, %v918
        %v1204 = vadd.f32 %v692, %v923
        %v1205 = vadd.f32 %v693, %v923
        %v1206 = vadd.f32 %v694, %v928
        %v1207 = vadd.f32 %v695, %v928
        %v1208 = vadd.f32 %v696, %v933
        %v1209 = vadd.f32 %v697, %v933
        %v1210 = vadd.f32 %v698, %v938
        %v1211 = vadd.f32 %v699, %v938
        %v1212 = vadd.f32 %v700, %v943
        %v1213 = vadd.f32 %v701, %v943
        %v1214 = vadd.f32 %v702, %v948
        %v1215 = vadd.f32 %v703, %v948
        %v1216 = vadd.f32 %v704, %v953
        %v1217 = vadd.f32 %v705, %v953
        %v1218 = vadd.f32 %v706, %v958
        %v1219 = vadd.f32 %v707, %v958
        %v1220 = vadd.f32 %v708, %v963
        %v1221 = vadd.f32 %v709, %v963
        %v1222 = vadd.f32 %v710, %v968
        %v1223 = vadd.f32 %v711, %v968
        %v1224 = vadd.f32 %v712, %v973
        %v1225 = vadd.f32 %v713, %v973
        %v1226 = vadd.f32 %v714, %v978
        %v1227 = vadd.f32 %v715, %v978
        %v1228 = vadd.f32 %v716, %v983
        %v1229 = vadd.f32 %v717, %v983
        %v1230 = vadd.f32 %v718, %v988
        %v1231 = vadd.f32 %v719, %v988
        %v1232 = vadd.f32 %v720, %v993
        %v1233 = vadd.f32 %v721, %v993
        %v1234 = vadd.f32 %v722, %v998
        %v1235 = vadd.f32 %v723, %v998
        %v1236 = vadd.f32 %v724, %v1003
        %v1237 = vadd.f32 %v725, %v1003
        %v1238 = vadd.f32 %v726, %v1008
        %v1239 = vadd.f32 %v727, %v1008
        %v1240 = vadd.f32 %v728, %v1013
        %v1241 = vadd.f32 %v729, %v1013
        %v1242 = vadd.f32 %v730, %v1018
        %v1243 = vadd.f32 %v731, %v1018
        %v1244 = vadd.f32 %v732, %v1023
        %v1245 = vadd.f32 %v733, %v1023
        %v1246 = vadd.f32 %v734, %v1028
        %v1247 = vadd.f32 %v735, %v1028
        %v1248 = vadd.f32 %v736, %v1033
        %v1249 = vadd.f32 %v737, %v1033
        %v1250 = vadd.f32 %v738, %v1038
        %v1251 = vadd.f32 %v739, %v1038
        %v1252 = vadd.f32 %v740, %v1043
        %v1253 = vadd.f32 %v741, %v1043
        %v1254 = vadd.f32 %v742, %v1048
        %v1255 = vadd.f32 %v743, %v1048
        %v1256 = vadd.f32 %v744, %v1053
        %v1257 = vadd.f32 %v745, %v1053
        %v1258 = vadd.f32 %v746, %v1058
        %v1259 = vadd.f32 %v747, %v1058
        %v1260 = vadd.f32 %v748, %v1063
        %v1261 = vadd.f32 %v749, %v1063
        %v1262 = vadd.f32 %v750, %v1068
        %v1263 = vadd.f32 %v751, %v1068
        %v1264 = vadd.f32 %v752, %v1073
        %v1265 = vadd.f32 %v753, %v1073
        %v1266 = vadd.f32 %v754, %v1078
        %v1267 = vadd.f32 %v755, %v1078
        %v1268 = vadd.f32 %v756, %v1083
        %v1269 = vadd.f32 %v757, %v1083
        %v1270 = vadd.f32 %v758, %v1088
        %v1271 = vadd.f32 %v759, %v1088
        %v1272 = vadd.f32 %v760, %v1093
        %v1273 = vadd.f32 %v761, %v1093
        %v1274 = vadd.f32 %v762, %v1098
        %v1275 = vadd.f32 %v763, %v1098
        %v1276 = vadd.f32 %v764, %v1103
        %v1277 = vadd.f32 %v765, %v1103
        %v1278 = vadd.f32 %v766, %v1108
        %v1279 = vadd.f32 %v767, %v1108
        %v1280 = vadd.f32 %v768, %v1113
        %v1281 = vadd.f32 %v769, %v1113
        %v1282 = vadd.f32 %v770, %v1118
        %v1283 = vadd.f32 %v771, %v1118
        %v1284 = vadd.f32 %v772, %v1123
        %v1285 = vadd.f32 %v773, %v1123
        %v1286 = vadd.f32 %v774, %v1128
        %v1287 = vadd.f32 %v775, %v1128
        %v1288 = vadd.f32 %v776, %v1133
        %v1289 = vadd.f32 %v777, %v1133
        %v1290 = vadd.f32 %v778, %v1138
        %v1291 = vadd.f32 %v779, %v1138
        %v1292 = vadd.f32 %v780, %v1143
        %v1293 = vadd.f32 %v781, %v1143
        %v1294 = vadd.f32 %v782, %v1148
        %v1295 = vadd.f32 %v783, %v1148
        %v1296 = vadd.f32 %v784, %v1153
        %v1297 = vadd.f32 %v785, %v1153
        %v1298 = vadd.f32 %v786, %v1158
        %v1299 = vadd.f32 %v787, %v1158
        %v1300 = vadd.f32 %v788, %v1163
        %v1301 = vadd.f32 %v789, %v1163
        %v1302 = vadd.f32 %v790, %v1168
        %v1303 = vadd.f32 %v791, %v1168
        %v1304 = vadd.f32 %v792, %v1173
        %v1305 = vadd.f32 %v793, %v1173
        %v1306 = vadd.f32 %v794, %v1178
        %v1307 = vadd.f32 %v795, %v1178
        %v1308 = vmax.f32 %v1180, 0.0
        %v1309 = vmax.f32 %v1181, 0.0
        %v1310 = vmax.f32 %v1182, 0.0
        %v1311 = vmax.f32 %v1183, 0.0
        %v1312 = vmax.f32 %v1184, 0.0
        %v1313 = vmax.f32 %v1185, 0.0
        %v1314 = vmax.f32 %v1186, 0.0
        %v1315 = vmax.f32 %v1187, 0.0
        %v1316 = vmax.f32 %v1188, 0.0
        %v1317 = vmax.f32 %v1189, 0.0
        %v1318 = vmax.f32 %v1190, 0.0
        %v1319 = vmax.f32 %v1191, 0.0
        %v1320 = vmax.f32 %v1192, 0.0
        %v1321 = vmax.f32 %v1193, 0.0
        %v1322 = vmax.f32 %v1194, 0.0
        %v1323 = vmax.f32 %v1195, 0.0
        %v1324 = vmax.f32 %v1196, 0.0
        %v1325 = vmax.f32 %v1197, 0.0
        %v1326 = vmax.f32 %v1198, 0.0
        %v1327 = vmax.f32 %v1199, 0.0
        %v1328 = vmax.f32 %v1200, 0.0
        %v1329 = vmax.f32 %v1201, 0.0
        %v1330 = vmax.f32 %v1202, 0.0
        %v1331 = vmax.f32 %v1203, 0.0
        %v1332 = vmax.f32 %v1204, 0.0
        %v1333 = vmax.f32 %v1205, 0.0
        %v1334 = vmax.f32 %v1206, 0.0
        %v1335 = vmax.f32 %v1207, 0.0
        %v1336 = vmax.f32 %v1208, 0.0
        %v1337 = vmax.f32 %v1209, 0.0
        %v1338 = vmax.f32 %v1210, 0.0
        %v1339 = vmax.f32 %v1211, 0.0
        %v1340 = vmax.f32 %v1212, 0.0
        %v1341 = vmax.f32 %v1213, 0.0
        %v1342 = vmax.f32 %v1214, 0.0
        %v1343 = vmax.f32 %v1215, 0.0
        %v1344 = vmax.f32 %v1216, 0.0
        %v1345 = vmax.f32 %v1217, 0.0
        %v1346 = vmax.f32 %v1218, 0.0
        %v1347 = vmax.f32 %v1219, 0.0
        %v1348 = vmax.f32 %v1220, 0.0
        %v1349 = vmax.f32 %v1221, 0.0
        %v1350 = vmax.f32 %v1222, 0.0
        %v1351 = vmax.f32 %v1223, 0.0
        %v1352 = vmax.f32 %v1224, 0.0
        %v1353 = vmax.f32 %v1225, 0.0
        %v1354 = vmax.f32 %v1226, 0.0
        %v1355 = vmax.f32 %v1227, 0.0
        %v1356 = vmax.f32 %v1228, 0.0
        %v1357 = vmax.f32 %v1229, 0.0
        %v1358 = vmax.f32 %v1230, 0.0
        %v1359 = vmax.f32 %v1231, 0.0
        %v1360 = vmax.f32 %v1232, 0.0
        %v1361 = vmax.f32 %v1233, 0.0
        %v1362 = vmax.f32 %v1234, 0.0
        %v1363 = vmax.f32 %v1235, 0.0
        %v1364 = vmax.f32 %v1236, 0.0
        %v1365 = vmax.f32 %v1237, 0.0
        %v1366 = vmax.f32 %v1238, 0.0
        %v1367 = vmax.f32 %v1239, 0.0
        %v1368 = vmax.f32 %v1240, 0.0
        %v1369 = vmax.f32 %v1241, 0.0
        %v1370 = vmax.f32 %v1242, 0.0
        %v1371 = vmax.f32 %v1243, 0.0
        %v1372 = vmax.f32 %v1244, 0.0
        %v1373 = vmax.f32 %v1245, 0.0
        %v1374 = vmax.f32 %v1246, 0.0
        %v1375 = vmax.f32 %v1247, 0.0
        %v1376 = vmax.f32 %v1248, 0.0
        %v1377 = vmax.f32 %v1249, 0.0
        %v1378 = vmax.f32 %v1250, 0.0
        %v1379 = vmax.f32 %v1251, 0.0
        %v1380 = vmax.f32 %v1252, 0.0
        %v1381 = vmax.f32 %v1253, 0.0
        %v1382 = vmax.f32 %v1254, 0.0
        %v1383 = vmax.f32 %v1255, 0.0
        %v1384 = vmax.f32 %v1256, 0.0
        %v1385 = vmax.f32 %v1257, 0.0
        %v1386 = vmax.f32 %v1258, 0.0
        %v1387 = vmax.f32 %v1259, 0.0
        %v1388 = vmax.f32 %v1260, 0.0
        %v1389 = vmax.f32 %v1261, 0.0
        %v1390 = vmax.f32 %v1262, 0.0
        %v1391 = vmax.f32 %v1263, 0.0
        %v1392 = vmax.f32 %v1264, 0.0
        %v1393 = vmax.f32 %v1265, 0.0
        %v1394 = vmax.f32 %v1266, 0.0
        %v1395 = vmax.f32 %v1267, 0.0
        %v1396 = vmax.f32 %v1268, 0.0
        %v1397 = vmax.f32 %v1269, 0.0
        %v1398 = vmax.f32 %v1270, 0.0
        %v1399 = vmax.f32 %v1271, 0.0
        %v1400 = vmax.f32 %v1272, 0.0
        %v1401 = vmax.f32 %v1273, 0.0
        %v1402 = vmax.f32 %v1274, 0.0
        %v1403 = vmax.f32 %v1275, 0.0
        %v1404 = vmax.f32 %v1276, 0.0
        %v1405 = vmax.f32 %v1277, 0.0
        %v1406 = vmax.f32 %v1278, 0.0
        %v1407 = vmax.f32 %v1279, 0.0
        %v1408 = vmax.f32 %v1280, 0.0
        %v1409 = vmax.f32 %v1281, 0.0
        %v1410 = vmax.f32 %v1282, 0.0
        %v1411 = vmax.f32 %v1283, 0.0
        %v1412 = vmax.f32 %v1284, 0.0
        %v1413 = vmax.f32 %v1285, 0.0
        %v1414 = vmax.f32 %v1286, 0.0
        %v1415 = vmax.f32 %v1287, 0.0
        %v1416 = vmax.f32 %v1288, 0.0
        %v1417 = vmax.f32 %v1289, 0.0
        %v1418 = vmax.f32 %v1290, 0.0
        %v1419 = vmax.f32 %v1291, 0.0
        %v1420 = vmax.f32 %v1292, 0.0
        %v1421 = vmax.f32 %v1293, 0.0
        %v1422 = vmax.f32 %v1294, 0.0
        %v1423 = vmax.f32 %v1295, 0.0
        %v1424 = vmax.f32 %v1296, 0.0
        %v1425 = vmax.f32 %v1297, 0.0
        %v1426 = vmax.f32 %v1298, 0.0
        %v1427 = vmax.f32 %v1299, 0.0
        %v1428 = vmax.f32 %v1300, 0.0
        %v1429 = vmax.f32 %v1301, 0.0
        %v1430 = vmax.f32 %v1302, 0.0
        %v1431 = vmax.f32 %v1303, 0.0
        %v1432 = vmax.f32 %v1304, 0.0
        %v1433 = vmax.f32 %v1305, 0.0
        %v1434 = vmax.f32 %v1306, 0.0
        %v1435 = vmax.f32 %v1307, 0.0
        %v1436 = vld [vmem:[%s3] sm:$0xff]
        %v1437 = vld [vmem:[%s3 + $0x8] sm:$0xff]
        %v1438 = vld [vmem:[%s3 + $0x10] sm:$0xff]
        %v1439 = vld [vmem:[%s3 + $0x18] sm:$0xff]
        %v1440 = vld [vmem:[%s3 + $0x20] sm:$0xff]
        %v1441 = vld [vmem:[%s3 + $0x28] sm:$0xff]
        %v1442 = vld [vmem:[%s3 + $0x30] sm:$0xff]
        %v1443 = vld [vmem:[%s3 + $0x38] sm:$0xff]
        %v1444 = vld [vmem:[%s3 + $0x40] sm:$0xff]
        %v1445 = vld [vmem:[%s3 + $0x48] sm:$0xff]
        %v1446 = vld [vmem:[%s3 + $0x50] sm:$0xff]
        %v1447 = vld [vmem:[%s3 + $0x58] sm:$0xff]
        %v1448 = vld [vmem:[%s3 + $0x60] sm:$0xff]
        %v1449 = vld [vmem:[%s3 + $0x68] sm:$0xff]
        %v1450 = vld [vmem:[%s3 + $0x70] sm:$0xff]
        %v1451 = vld [vmem:[%s3 + $0x78] sm:$0xff]
        %v1452 = vld [vmem:[%s3 + $0x80] sm:$0xff]
        %v1453 = vld [vmem:[%s3 + $0x88] sm:$0xff]
        %v1454 = vld [vmem:[%s3 + $0x90] sm:$0xff]
        %v1455 = vld [vmem:[%s3 + $0x98] sm:$0xff]
        %v1456 = vld [vmem:[%s3 + $0xa0] sm:$0xff]
        %v1457 = vld [vmem:[%s3 + $0xa8] sm:$0xff]
        %v1458 = vld [vmem:[%s3 + $0xb0] sm:$0xff]
        %v1459 = vld [vmem:[%s3 + $0xb8] sm:$0xff]
        %v1460 = vld [vmem:[%s3 + $0xc0] sm:$0xff]
        %v1461 = vld [vmem:[%s3 + $0xc8] sm:$0xff]
        %v1462 = vld [vmem:[%s3 + $0xd0] sm:$0xff]
        %v1463 = vld [vmem:[%s3 + $0xd8] sm:$0xff]
        %v1464 = vld [vmem:[%s3 + $0xe0] sm:$0xff]
        %v1465 = vld [vmem:[%s3 + $0xe8] sm:$0xff]
        %v1466 = vld [vmem:[%s3 + $0xf0] sm:$0xff]
        %v1467 = vld [vmem:[%s3 + $0xf8] sm:$0xff]
        %v1468 = vld [vmem:[%s3 + $0x100] sm:$0xff]
        %v1469 = vld [vmem:[%s3 + $0x108] sm:$0xff]
        %v1470 = vld [vmem:[%s3 + $0x110] sm:$0xff]
        %v1471 = vld [vmem:[%s3 + $0x118] sm:$0xff]
        %v1472 = vld [vmem:[%s3 + $0x120] sm:$0xff]
        %v1473 = vld [vmem:[%s3 + $0x128] sm:$0xff]
        %v1474 = vld [vmem:[%s3 + $0x130] sm:$0xff]
        %v1475 = vld [vmem:[%s3 + $0x138] sm:$0xff]
        %v1476 = vld [vmem:[%s3 + $0x140] sm:$0xff]
        %v1477 = vld [vmem:[%s3 + $0x148] sm:$0xff]
        %v1478 = vld [vmem:[%s3 + $0x150] sm:$0xff]
        %v1479 = vld [vmem:[%s3 + $0x158] sm:$0xff]
        %v1480 = vld [vmem:[%s3 + $0x160] sm:$0xff]
        %v1481 = vld [vmem:[%s3 + $0x168] sm:$0xff]
        %v1482 = vld [vmem:[%s3 + $0x170] sm:$0xff]
        %v1483 = vld [vmem:[%s3 + $0x178] sm:$0xff]
        %v1484 = vld [vmem:[%s3 + $0x180] sm:$0xff]
        %v1485 = vld [vmem:[%s3 + $0x188] sm:$0xff]
        %v1486 = vld [vmem:[%s3 + $0x190] sm:$0xff]
        %v1487 = vld [vmem:[%s3 + $0x198] sm:$0xff]
        %v1488 = vld [vmem:[%s3 + $0x1a0] sm:$0xff]
        %v1489 = vld [vmem:[%s3 + $0x1a8] sm:$0xff]
        %v1490 = vld [vmem:[%s3 + $0x1b0] sm:$0xff]
        %v1491 = vld [vmem:[%s3 + $0x1b8] sm:$0xff]
        %v1492 = vld [vmem:[%s3 + $0x1c0] sm:$0xff]
        %v1493 = vld [vmem:[%s3 + $0x1c8] sm:$0xff]
        %v1494 = vld [vmem:[%s3 + $0x1d0] sm:$0xff]
        %v1495 = vld [vmem:[%s3 + $0x1d8] sm:$0xff]
        %v1496 = vld [vmem:[%s3 + $0x1e0] sm:$0xff]
        %v1497 = vld [vmem:[%s3 + $0x1e8] sm:$0xff]
        %v1498 = vld [vmem:[%s3 + $0x1f0] sm:$0xff]
        %v1499 = vld [vmem:[%s3 + $0x1f8] sm:$0xff]
        %v1500 = vld [vmem:[%s3 + $0x200] sm:$0xff]
        %v1501 = vld [vmem:[%s3 + $0x208] sm:$0xff]
        %v1502 = vld [vmem:[%s3 + $0x210] sm:$0xff]
        %v1503 = vld [vmem:[%s3 + $0x218] sm:$0xff]
        %v1504 = vld [vmem:[%s3 + $0x220] sm:$0xff]
        %v1505 = vld [vmem:[%s3 + $0x228] sm:$0xff]
        %v1506 = vld [vmem:[%s3 + $0x230] sm:$0xff]
        %v1507 = vld [vmem:[%s3 + $0x238] sm:$0xff]
        %v1508 = vld [vmem:[%s3 + $0x240] sm:$0xff]
        %v1509 = vld [vmem:[%s3 + $0x248] sm:$0xff]
        %v1510 = vld [vmem:[%s3 + $0x250] sm:$0xff]
        %v1511 = vld [vmem:[%s3 + $0x258] sm:$0xff]
        %v1512 = vld [vmem:[%s3 + $0x260] sm:$0xff]
        %v1513 = vld [vmem:[%s3 + $0x268] sm:$0xff]
        %v1514 = vld [vmem:[%s3 + $0x270] sm:$0xff]
        %v1515 = vld [vmem:[%s3 + $0x278] sm:$0xff]
        %v1516 = vld [vmem:[%s3 + $0x280] sm:$0xff]
        %v1517 = vld [vmem:[%s3 + $0x288] sm:$0xff]
        %v1518 = vld [vmem:[%s3 + $0x290] sm:$0xff]
        %v1519 = vld [vmem:[%s3 + $0x298] sm:$0xff]
        %v1520 = vld [vmem:[%s3 + $0x2a0] sm:$0xff]
        %v1521 = vld [vmem:[%s3 + $0x2a8] sm:$0xff]
        %v1522 = vld [vmem:[%s3 + $0x2b0] sm:$0xff]
        %v1523 = vld [vmem:[%s3 + $0x2b8] sm:$0xff]
        %v1524 = vld [vmem:[%s3 + $0x2c0] sm:$0xff]
        %v1525 = vld [vmem:[%s3 + $0x2c8] sm:$0xff]
        %v1526 = vld [vmem:[%s3 + $0x2d0] sm:$0xff]
        %v1527 = vld [vmem:[%s3 + $0x2d8] sm:$0xff]
        %v1528 = vld [vmem:[%s3 + $0x2e0] sm:$0xff]
        %v1529 = vld [vmem:[%s3 + $0x2e8] sm:$0xff]
        %v1530 = vld [vmem:[%s3 + $0x2f0] sm:$0xff]
        %v1531 = vld [vmem:[%s3 + $0x2f8] sm:$0xff]
        %v1532 = vld [vmem:[%s3 + $0x300] sm:$0xff]
        %v1533 = vld [vmem:[%s3 + $0x308] sm:$0xff]
        %v1534 = vld [vmem:[%s3 + $0x310] sm:$0xff]
        %v1535 = vld [vmem:[%s3 + $0x318] sm:$0xff]
        %v1536 = vld [vmem:[%s3 + $0x320] sm:$0xff]
        %v1537 = vld [vmem:[%s3 + $0x328] sm:$0xff]
        %v1538 = vld [vmem:[%s3 + $0x330] sm:$0xff]
        %v1539 = vld [vmem:[%s3 + $0x338] sm:$0xff]
        %v1540 = vld [vmem:[%s3 + $0x340] sm:$0xff]
        %v1541 = vld [vmem:[%s3 + $0x348] sm:$0xff]
        %v1542 = vld [vmem:[%s3 + $0x350] sm:$0xff]
        %v1543 = vld [vmem:[%s3 + $0x358] sm:$0xff]
        %v1544 = vld [vmem:[%s3 + $0x360] sm:$0xff]
        %v1545 = vld [vmem:[%s3 + $0x368] sm:$0xff]
        %v1546 = vld [vmem:[%s3 + $0x370] sm:$0xff]
        %v1547 = vld [vmem:[%s3 + $0x378] sm:$0xff]
        %v1548 = vld [vmem:[%s3 + $0x380] sm:$0xff]
        %v1549 = vld [vmem:[%s3 + $0x388] sm:$0xff]
        %v1550 = vld [vmem:[%s3 + $0x390] sm:$0xff]
        %v1551 = vld [vmem:[%s3 + $0x398] sm:$0xff]
        %v1552 = vld [vmem:[%s3 + $0x3a0] sm:$0xff]
        %v1553 = vld [vmem:[%s3 + $0x3a8] sm:$0xff]
        %v1554 = vld [vmem:[%s3 + $0x3b0] sm:$0xff]
        %v1555 = vld [vmem:[%s3 + $0x3b8] sm:$0xff]
        %v1556 = vld [vmem:[%s3 + $0x3c0] sm:$0xff]
        %v1557 = vld [vmem:[%s3 + $0x3c8] sm:$0xff]
        %v1558 = vld [vmem:[%s3 + $0x3d0] sm:$0xff]
        %v1559 = vld [vmem:[%s3 + $0x3d8] sm:$0xff]
        %v1560 = vld [vmem:[%s3 + $0x3e0] sm:$0xff]
        %v1561 = vld [vmem:[%s3 + $0x3e8] sm:$0xff]
        %v1562 = vld [vmem:[%s3 + $0x3f0] sm:$0xff]
        %v1563 = vld [vmem:[%s3 + $0x3f8] sm:$0xff]
        %v1564 = vld [vmem:[%s4] sm:$0xff]
        %v1565 = vld [vmem:[%s4 + $0x8] sm:$0xff]
        %v1566 = vld [vmem:[%s4 + $0x10] sm:$0xff]
        %v1567 = vld [vmem:[%s4 + $0x18] sm:$0xff]
        %v1568 = vld [vmem:[%s4 + $0x20] sm:$0xff]
        %v1569 = vld [vmem:[%s4 + $0x28] sm:$0xff]
        %v1570 = vld [vmem:[%s4 + $0x30] sm:$0xff]
        %v1571 = vld [vmem:[%s4 + $0x38] sm:$0xff]
        %v1572 = vld [vmem:[%s4 + $0x40] sm:$0xff]
        %v1573 = vld [vmem:[%s4 + $0x48] sm:$0xff]
        %v1574 = vld [vmem:[%s4 + $0x50] sm:$0xff]
        %v1575 = vld [vmem:[%s4 + $0x58] sm:$0xff]
        %v1576 = vld [vmem:[%s4 + $0x60] sm:$0xff]
        %v1577 = vld [vmem:[%s4 + $0x68] sm:$0xff]
        %v1578 = vld [vmem:[%s4 + $0x70] sm:$0xff]
        %v1579 = vld [vmem:[%s4 + $0x78] sm:$0xff]
        %v1580 = vld [vmem:[%s4 + $0x80] sm:$0xff]
        %v1581 = vld [vmem:[%s4 + $0x88] sm:$0xff]
        %v1582 = vld [vmem:[%s4 + $0x90] sm:$0xff]
        %v1583 = vld [vmem:[%s4 + $0x98] sm:$0xff]
        %v1584 = vld [vmem:[%s4 + $0xa0] sm:$0xff]
        %v1585 = vld [vmem:[%s4 + $0xa8] sm:$0xff]
        %v1586 = vld [vmem:[%s4 + $0xb0] sm:$0xff]
        %v1587 = vld [vmem:[%s4 + $0xb8] sm:$0xff]
        %v1588 = vld [vmem:[%s4 + $0xc0] sm:$0xff]
        %v1589 = vld [vmem:[%s4 + $0xc8] sm:$0xff]
        %v1590 = vld [vmem:[%s4 + $0xd0] sm:$0xff]
        %v1591 = vld [vmem:[%s4 + $0xd8] sm:$0xff]
        %v1592 = vld [vmem:[%s4 + $0xe0] sm:$0xff]
        %v1593 = vld [vmem:[%s4 + $0xe8] sm:$0xff]
        %v1594 = vld [vmem:[%s4 + $0xf0] sm:$0xff]
        %v1595 = vld [vmem:[%s4 + $0xf8] sm:$0xff]
        %1597 = vset.pattern.permute.xlu0 0
        %1598 = vperm.xlu0 %1597, %v1564
        %v1599 = vpop.permute.xlu0 %1598
        %1602 = vset.pattern.permute.xlu0 0
        %1603 = vperm.xlu0 %1602, %v1565
        %v1604 = vpop.permute.xlu0 %1603
        %1607 = vset.pattern.permute.xlu0 0
        %1608 = vperm.xlu0 %1607, %v1566
        %v1609 = vpop.permute.xlu0 %1608
        %1612 = vset.pattern.permute.xlu0 0
        %1613 = vperm.xlu0 %1612, %v1567
        %v1614 = vpop.permute.xlu0 %1613
        %1617 = vset.pattern.permute.xlu0 0
        %1618 = vperm.xlu0 %1617, %v1568
        %v1619 = vpop.permute.xlu0 %1618
        %1622 = vset.pattern.permute.xlu0 0
        %1623 = vperm.xlu0 %1622, %v1569
        %v1624 = vpop.permute.xlu0 %1623
        %1627 = vset.pattern.permute.xlu0 0
        %1628 = vperm.xlu0 %1627, %v1570
        %v1629 = vpop.permute.xlu0 %1628
        %1632 = vset.pattern.permute.xlu0 0
        %1633 = vperm.xlu0 %1632, %v1571
        %v1634 = vpop.permute.xlu0 %1633
        %1637 = vset.pattern.permute.xlu0 0
        %1638 = vperm.xlu0 %1637, %v1572
        %v1639 = vpop.permute.xlu0 %1638
        %1642 = vset.pattern.permute.xlu0 0
        %1643 = vperm.xlu0 %1642, %v1573
        %v1644 = vpop.permute.xlu0 %1643
        %1647 = vset.pattern.permute.xlu0 0
        %1648 = vperm.xlu0 %1647, %v1574
        %v1649 = vpop.permute.xlu0 %1648
        %1652 = vset.pattern.permute.xlu0 0
        %1653 = vperm.xlu0 %1652, %v1575
        %v1654 = vpop.permute.xlu0 %1653
        %1657 = vset.pattern.permute.xlu0 0
        %1658 = vperm.xlu0 %1657, %v1576
        %v1659 = vpop.permute.xlu0 %1658
        %1662 = vset.pattern.permute.xlu0 0
        %1663 = vperm.xlu0 %1662, %v1577
        %v1664 = vpop.permute.xlu0 %1663
        %1667 = vset.pattern.permute.xlu0 0
        %1668 = vperm.xlu0 %1667, %v1578
        %v1669 = vpop.permute.xlu0 %1668
        %1672 = vset.pattern.permute.xlu0 0
        %1673 = vperm.xlu0 %1672, %v1579
        %v1674 = vpop.permute.xlu0 %1673
        %1677 = vset.pattern.permute.xlu0 0
        %1678 = vperm.xlu0 %1677, %v1580
        %v1679 = vpop.permute.xlu0 %1678
        %1682 = vset.pattern.permute.xlu0 0
        %1683 = vperm.xlu0 %1682, %v1581
        %v1684 = vpop.permute.xlu0 %1683
        %1687 = vset.pattern.permute.xlu0 0
        %1688 = vperm.xlu0 %1687, %v1582
        %v1689 = vpop.permute.xlu0 %1688
        %1692 = vset.pattern.permute.xlu0 0
        %1693 = vperm.xlu0 %1692, %v1583
        %v1694 = vpop.permute.xlu0 %1693
        %1697 = vset.pattern.permute.xlu0 0
        %1698 = vperm.xlu0 %1697, %v1584
        %v1699 = vpop.permute.xlu0 %1698
        %1702 = vset.pattern.permute.xlu0 0
        %1703 = vperm.xlu0 %1702, %v1585
        %v1704 = vpop.permute.xlu0 %1703
        %1707 = vset.pattern.permute.xlu0 0
        %1708 = vperm.xlu0 %1707, %v1586
        %v1709 = vpop.permute.xlu0 %1708
        %1712 = vset.pattern.permute.xlu0 0
        %1713 = vperm.xlu0 %1712, %v1587
        %v1714 = vpop.permute.xlu0 %1713
        %1717 = vset.pattern.permute.xlu0 0
        %1718 = vperm.xlu0 %1717, %v1588
        %v1719 = vpop.permute.xlu0 %1718
        %1722 = vset.pattern.permute.xlu0 0
        %1723 = vperm.xlu0 %1722, %v1589
        %v1724 = vpop.permute.xlu0 %1723
        %1727 = vset.pattern.permute.xlu0 0
        %1728 = vperm.xlu0 %1727, %v1590
        %v1729 = vpop.permute.xlu0 %1728
        %1732 = vset.pattern.permute.xlu0 0
        %1733 = vperm.xlu0 %1732, %v1591
        %v1734 = vpop.permute.xlu0 %1733
        %1737 = vset.pattern.permute.xlu0 0
        %1738 = vperm.xlu0 %1737, %v1592
        %v1739 = vpop.permute.xlu0 %1738
        %1742 = vset.pattern.permute.xlu0 0
        %1743 = vperm.xlu0 %1742, %v1593
        %v1744 = vpop.permute.xlu0 %1743
        %1747 = vset.pattern.permute.xlu0 0
        %1748 = vperm.xlu0 %1747, %v1594
        %v1749 = vpop.permute.xlu0 %1748
        %1752 = vset.pattern.permute.xlu0 0
        %1753 = vperm.xlu0 %1752, %v1595
        %v1754 = vpop.permute.xlu0 %1753
        %1756 = vmatpush.msra.mxu0 %v1338
        %1757 = vmatpush.msra.mxu0 %v1336
        %1758 = vmatpush.msra.mxu0 %v1334
        %1759 = vmatpush.msra.mxu0 %v1332
        %1760 = vmatpush.msra.mxu0 %v1330
        %1761 = vmatpush.msra.mxu0 %v1328
        %1762 = vmatpush.msra.mxu0 %v1326
        %1763 = vmatpush.msra.mxu0 %v1324
        %1764 = vmatpush.msra.mxu0 %v1322
        %1765 = vmatpush.msra.mxu0 %v1320
        %1766 = vmatpush.msra.mxu0 %v1318
        %1767 = vmatpush.msra.mxu0 %v1316
        %1768 = vmatpush.msra.mxu0 %v1314
        %1769 = vmatpush.msra.mxu0 %v1312
        %1770 = vmatpush.msra.mxu0 %v1310
        %1771 = vmatpush.msra.mxu0 %v1308
        %1772 = vmatmul.f32.gmra.mxu0 %v1436
        %v1773 = vpop.f32.mrf.mxu0
        %v1774 = vadd.f32 %v1599, %v1773
        %1775 = vmatmul.f32.gmra.mxu0 %v1440
        %v1776 = vpop.f32.mrf.mxu0
        %v1777 = vadd.f32 %v1604, %v1776
        %1778 = vmatmul.f32.gmra.mxu0 %v1444
        %v1779 = vpop.f32.mrf.mxu0
        %v1780 = vadd.f32 %v1609, %v1779
        %1781 = vmatmul.f32.gmra.mxu0 %v1448
        %v1782 = vpop.f32.mrf.mxu0
        %v1783 = vadd.f32 %v1614, %v1782
        %1784 = vmatmul.f32.gmra.mxu0 %v1452
        %v1785 = vpop.f32.mrf.mxu0
        %v1786 = vadd.f32 %v1619, %v1785
        %1787 = vmatmul.f32.gmra.mxu0 %v1456
        %v1788 = vpop.f32.mrf.mxu0
        %v1789 = vadd.f32 %v1624, %v1788
        %1790 = vmatmul.f32.gmra.mxu0 %v1460
        %v1791 = vpop.f32.mrf.mxu0
        %v1792 = vadd.f32 %v1629, %v1791
        %1793 = vmatmul.f32.gmra.mxu0 %v1464
        %v1794 = vpop.f32.mrf.mxu0
        %v1795 = vadd.f32 %v1634, %v1794
        %1796 = vmatmul.f32.gmra.mxu0 %v1468
        %v1797 = vpop.f32.mrf.mxu0
        %v1798 = vadd.f32 %v1639, %v1797
        %1799 = vmatmul.f32.gmra.mxu0 %v1472
        %v1800 = vpop.f32.mrf.mxu0
        %v1801 = vadd.f32 %v1644, %v1800
        %1802 = vmatmul.f32.gmra.mxu0 %v1476
        %v1803 = vpop.f32.mrf.mxu0
        %v1804 = vadd.f32 %v1649, %v1803
        %1805 = vmatmul.f32.gmra.mxu0 %v1480
        %v1806 = vpop.f32.mrf.mxu0
        %v1807 = vadd.f32 %v1654, %v1806
        %1808 = vmatmul.f32.gmra.mxu0 %v1484
        %v1809 = vpop.f32.mrf.mxu0
        %v1810 = vadd.f32 %v1659, %v1809
        %1811 = vmatmul.f32.gmra.mxu0 %v1488
        %v1812 = vpop.f32.mrf.mxu0
        %v1813 = vadd.f32 %v1664, %v1812
        %1814 = vmatmul.f32.gmra.mxu0 %v1492
        %v1815 = vpop.f32.mrf.mxu0
        %v1816 = vadd.f32 %v1669, %v1815
        %1817 = vmatmul.f32.gmra.mxu0 %v1496
        %v1818 = vpop.f32.mrf.mxu0
        %v1819 = vadd.f32 %v1674, %v1818
        %1820 = vmatmul.f32.gmra.mxu0 %v1500
        %v1821 = vpop.f32.mrf.mxu0
        %v1822 = vadd.f32 %v1679, %v1821
        %1823 = vmatmul.f32.gmra.mxu0 %v1504
        %v1824 = vpop.f32.mrf.mxu0
        %v1825 = vadd.f32 %v1684, %v1824
        %1826 = vmatmul.f32.gmra.mxu0 %v1508
        %v1827 = vpop.f32.mrf.mxu0
        %v1828 = vadd.f32 %v1689, %v1827
        %1829 = vmatmul.f32.gmra.mxu0 %v1512
        %v1830 = vpop.f32.mrf.mxu0
        %v1831 = vadd.f32 %v1694, %v1830
        %1832 = vmatmul.f32.gmra.mxu0 %v1516
        %v1833 = vpop.f32.mrf.mxu0
        %v1834 = vadd.f32 %v1699, %v1833
        %1835 = vmatmul.f32.gmra.mxu0 %v1520
        %v1836 = vpop.f32.mrf.mxu0
        %v1837 = vadd.f32 %v1704, %v1836
        %1838 = vmatmul.f32.gmra.mxu0 %v1524
        %v1839 = vpop.f32.mrf.mxu0
        %v1840 = vadd.f32 %v1709, %v1839
        %1841 = vmatmul.f32.gmra.mxu0 %v1528
        %v1842 = vpop.f32.mrf.mxu0
        %v1843 = vadd.f32 %v1714, %v1842
        %1844 = vmatmul.f32.gmra.mxu0 %v1532
        %v1845 = vpop.f32.mrf.mxu0
        %v1846 = vadd.f32 %v1719, %v1845
        %1847 = vmatmul.f32.gmra.mxu0 %v1536
        %v1848 = vpop.f32.mrf.mxu0
        %v1849 = vadd.f32 %v1724, %v1848
        %1850 = vmatmul.f32.gmra.mxu0 %v1540
        %v1851 = vpop.f32.mrf.mxu0
        %v1852 = vadd.f32 %v1729, %v1851
        %1853 = vmatmul.f32.gmra.mxu0 %v1544
        %v1854 = vpop.f32.mrf.mxu0
        %v1855 = vadd.f32 %v1734, %v1854
        %1856 = vmatmul.f32.gmra.mxu0 %v1548
        %v1857 = vpop.f32.mrf.mxu0
        %v1858 = vadd.f32 %v1739, %v1857
        %1859 = vmatmul.f32.gmra.mxu0 %v1552
        %v1860 = vpop.f32.mrf.mxu0
        %v1861 = vadd.f32 %v1744, %v1860
        %1862 = vmatmul.f32.gmra.mxu0 %v1556
        %v1863 = vpop.f32.mrf.mxu0
        %v1864 = vadd.f32 %v1749, %v1863
        %1865 = vmatmul.f32.gmra.mxu0 %v1560
        %v1866 = vpop.f32.mrf.mxu0
        %v1867 = vadd.f32 %v1754, %v1866
        %1868 = vdwg.mxu0
        %1869 = vmatpush.msra.mxu0 %v1370
        %1870 = vmatpush.msra.mxu0 %v1368
        %1871 = vmatpush.msra.mxu0 %v1366
        %1872 = vmatpush.msra.mxu0 %v1364
        %1873 = vmatpush.msra.mxu0 %v1362
        %1874 = vmatpush.msra.mxu0 %v1360
        %1875 = vmatpush.msra.mxu0 %v1358
        %1876 = vmatpush.msra.mxu0 %v1356
        %1877 = vmatpush.msra.mxu0 %v1354
        %1878 = vmatpush.msra.mxu0 %v1352
        %1879 = vmatpush.msra.mxu0 %v1350
        %1880 = vmatpush.msra.mxu0 %v1348
        %1881 = vmatpush.msra.mxu0 %v1346
        %1882 = vmatpush.msra.mxu0 %v1344
        %1883 = vmatpush.msra.mxu0 %v1342
        %1884 = vmatpush.msra.mxu0 %v1340
        %1885 = vmatmul.f32.gmra.mxu0 %v1437
        %v1886 = vpop.f32.mrf.mxu0
        %v1887 = vadd.f32 %v1774, %v1886
        %1888 = vmatmul.f32.gmra.mxu0 %v1441
        %v1889 = vpop.f32.mrf.mxu0
        %v1890 = vadd.f32 %v1777, %v1889
        %1891 = vmatmul.f32.gmra.mxu0 %v1445
        %v1892 = vpop.f32.mrf.mxu0
        %v1893 = vadd.f32 %v1780, %v1892
        %1894 = vmatmul.f32.gmra.mxu0 %v1449
        %v1895 = vpop.f32.mrf.mxu0
        %v1896 = vadd.f32 %v1783, %v1895
        %1897 = vmatmul.f32.gmra.mxu0 %v1453
        %v1898 = vpop.f32.mrf.mxu0
        %v1899 = vadd.f32 %v1786, %v1898
        %1900 = vmatmul.f32.gmra.mxu0 %v1457
        %v1901 = vpop.f32.mrf.mxu0
        %v1902 = vadd.f32 %v1789, %v1901
        %1903 = vmatmul.f32.gmra.mxu0 %v1461
        %v1904 = vpop.f32.mrf.mxu0
        %v1905 = vadd.f32 %v1792, %v1904
        %1906 = vmatmul.f32.gmra.mxu0 %v1465
        %v1907 = vpop.f32.mrf.mxu0
        %v1908 = vadd.f32 %v1795, %v1907
        %1909 = vmatmul.f32.gmra.mxu0 %v1469
        %v1910 = vpop.f32.mrf.mxu0
        %v1911 = vadd.f32 %v1798, %v1910
        %1912 = vmatmul.f32.gmra.mxu0 %v1473
        %v1913 = vpop.f32.mrf.mxu0
        %v1914 = vadd.f32 %v1801, %v1913
        %1915 = vmatmul.f32.gmra.mxu0 %v1477
        %v1916 = vpop.f32.mrf.mxu0
        %v1917 = vadd.f32 %v1804, %v1916
        %1918 = vmatmul.f32.gmra.mxu0 %v1481
        %v1919 = vpop.f32.mrf.mxu0
        %v1920 = vadd.f32 %v1807, %v1919
        %1921 = vmatmul.f32.gmra.mxu0 %v1485
        %v1922 = vpop.f32.mrf.mxu0
        %v1923 = vadd.f32 %v1810, %v1922
        %1924 = vmatmul.f32.gmra.mxu0 %v1489
        %v1925 = vpop.f32.mrf.mxu0
        %v1926 = vadd.f32 %v1813, %v1925
        %1927 = vmatmul.f32.gmra.mxu0 %v1493
        %v1928 = vpop.f32.mrf.mxu0
        %v1929 = vadd.f32 %v1816, %v1928
        %1930 = vmatmul.f32.gmra.mxu0 %v1497
        %v1931 = vpop.f32.mrf.mxu0
        %v1932 = vadd.f32 %v1819, %v1931
        %1933 = vmatmul.f32.gmra.mxu0 %v1501
        %v1934 = vpop.f32.mrf.mxu0
        %v1935 = vadd.f32 %v1822, %v1934
        %1936 = vmatmul.f32.gmra.mxu0 %v1505
        %v1937 = vpop.f32.mrf.mxu0
        %v1938 = vadd.f32 %v1825, %v1937
        %1939 = vmatmul.f32.gmra.mxu0 %v1509
        %v1940 = vpop.f32.mrf.mxu0
        %v1941 = vadd.f32 %v1828, %v1940
        %1942 = vmatmul.f32.gmra.mxu0 %v1513
        %v1943 = vpop.f32.mrf.mxu0
        %v1944 = vadd.f32 %v1831, %v1943
        %1945 = vmatmul.f32.gmra.mxu0 %v1517
        %v1946 = vpop.f32.mrf.mxu0
        %v1947 = vadd.f32 %v1834, %v1946
        %1948 = vmatmul.f32.gmra.mxu0 %v1521
        %v1949 = vpop.f32.mrf.mxu0
        %v1950 = vadd.f32 %v1837, %v1949
        %1951 = vmatmul.f32.gmra.mxu0 %v1525
        %v1952 = vpop.f32.mrf.mxu0
        %v1953 = vadd.f32 %v1840, %v1952
        %1954 = vmatmul.f32.gmra.mxu0 %v1529
        %v1955 = vpop.f32.mrf.mxu0
        %v1956 = vadd.f32 %v1843, %v1955
        %1957 = vmatmul.f32.gmra.mxu0 %v1533
        %v1958 = vpop.f32.mrf.mxu0
        %v1959 = vadd.f32 %v1846, %v1958
        %1960 = vmatmul.f32.gmra.mxu0 %v1537
        %v1961 = vpop.f32.mrf.mxu0
        %v1962 = vadd.f32 %v1849, %v1961
        %1963 = vmatmul.f32.gmra.mxu0 %v1541
        %v1964 = vpop.f32.mrf.mxu0
        %v1965 = vadd.f32 %v1852, %v1964
        %1966 = vmatmul.f32.gmra.mxu0 %v1545
        %v1967 = vpop.f32.mrf.mxu0
        %v1968 = vadd.f32 %v1855, %v1967
        %1969 = vmatmul.f32.gmra.mxu0 %v1549
        %v1970 = vpop.f32.mrf.mxu0
        %v1971 = vadd.f32 %v1858, %v1970
        %1972 = vmatmul.f32.gmra.mxu0 %v1553
        %v1973 = vpop.f32.mrf.mxu0
        %v1974 = vadd.f32 %v1861, %v1973
        %1975 = vmatmul.f32.gmra.mxu0 %v1557
        %v1976 = vpop.f32.mrf.mxu0
        %v1977 = vadd.f32 %v1864, %v1976
        %1978 = vmatmul.f32.gmra.mxu0 %v1561
        %v1979 = vpop.f32.mrf.mxu0
        %v1980 = vadd.f32 %v1867, %v1979
        %1981 = vdwg.mxu0
        %1982 = vmatpush.msra.mxu0 %v1402
        %1983 = vmatpush.msra.mxu0 %v1400
        %1984 = vmatpush.msra.mxu0 %v1398
        %1985 = vmatpush.msra.mxu0 %v1396
        %1986 = vmatpush.msra.mxu0 %v1394
        %1987 = vmatpush.msra.mxu0 %v1392
        %1988 = vmatpush.msra.mxu0 %v1390
        %1989 = vmatpush.msra.mxu0 %v1388
        %1990 = vmatpush.msra.mxu0 %v1386
        %1991 = vmatpush.msra.mxu0 %v1384
        %1992 = vmatpush.msra.mxu0 %v1382
        %1993 = vmatpush.msra.mxu0 %v1380
        %1994 = vmatpush.msra.mxu0 %v1378
        %1995 = vmatpush.msra.mxu0 %v1376
        %1996 = vmatpush.msra.mxu0 %v1374
        %1997 = vmatpush.msra.mxu0 %v1372
        %1998 = vmatmul.f32.gmra.mxu0 %v1438
        %v1999 = vpop.f32.mrf.mxu0
        %v2000 = vadd.f32 %v1887, %v1999
        %2001 = vmatmul.f32.gmra.mxu0 %v1442
        %v2002 = vpop.f32.mrf.mxu0
        %v2003 = vadd.f32 %v1890, %v2002
        %2004 = vmatmul.f32.gmra.mxu0 %v1446
        %v2005 = vpop.f32.mrf.mxu0
        %v2006 = vadd.f32 %v1893, %v2005
        %2007 = vmatmul.f32.gmra.mxu0 %v1450
        %v2008 = vpop.f32.mrf.mxu0
        %v2009 = vadd.f32 %v1896, %v2008
        %2010 = vmatmul.f32.gmra.mxu0 %v1454
        %v2011 = vpop.f32.mrf.mxu0
        %v2012 = vadd.f32 %v1899, %v2011
        %2013 = vmatmul.f32.gmra.mxu0 %v1458
        %v2014 = vpop.f32.mrf.mxu0
        %v2015 = vadd.f32 %v1902, %v2014
        %2016 = vmatmul.f32.gmra.mxu0 %v1462
        %v2017 = vpop.f32.mrf.mxu0
        %v2018 = vadd.f32 %v1905, %v2017
        %2019 = vmatmul.f32.gmra.mxu0 %v1466
        %v2020 = vpop.f32.mrf.mxu0
        %v2021 = vadd.f32 %v1908, %v2020
        %2022 = vmatmul.f32.gmra.mxu0 %v1470
        %v2023 = vpop.f32.mrf.mxu0
        %v2024 = vadd.f32 %v1911, %v2023
        %2025 = vmatmul.f32.gmra.mxu0 %v1474
        %v2026 = vpop.f32.mrf.mxu0
        %v2027 = vadd.f32 %v1914, %v2026
        %2028 = vmatmul.f32.gmra.mxu0 %v1478
        %v2029 = vpop.f32.mrf.mxu0
        %v2030 = vadd.f32 %v1917, %v2029
        %2031 = vmatmul.f32.gmra.mxu0 %v1482
        %v2032 = vpop.f32.mrf.mxu0
        %v2033 = vadd.f32 %v1920, %v2032
        %2034 = vmatmul.f32.gmra.mxu0 %v1486
        %v2035 = vpop.f32.mrf.mxu0
        %v2036 = vadd.f32 %v1923, %v2035
        %2037 = vmatmul.f32.gmra.mxu0 %v1490
        %v2038 = vpop.f32.mrf.mxu0
        %v2039 = vadd.f32 %v1926, %v2038
        %2040 = vmatmul.f32.gmra.mxu0 %v1494
        %v2041 = vpop.f32.mrf.mxu0
        %v2042 = vadd.f32 %v1929, %v2041
        %2043 = vmatmul.f32.gmra.mxu0 %v1498
        %v2044 = vpop.f32.mrf.mxu0
        %v2045 = vadd.f32 %v1932, %v2044
        %2046 = vmatmul.f32.gmra.mxu0 %v1502
        %v2047 = vpop.f32.mrf.mxu0
        %v2048 = vadd.f32 %v1935, %v2047
        %2049 = vmatmul.f32.gmra.mxu0 %v1506
        %v2050 = vpop.f32.mrf.mxu0
        %v2051 = vadd.f32 %v1938, %v2050
        %2052 = vmatmul.f32.gmra.mxu0 %v1510
        %v2053 = vpop.f32.mrf.mxu0
        %v2054 = vadd.f32 %v1941, %v2053
        %2055 = vmatmul.f32.gmra.mxu0 %v1514
        %v2056 = vpop.f32.mrf.mxu0
        %v2057 = vadd.f32 %v1944, %v2056
        %2058 = vmatmul.f32.gmra.mxu0 %v1518
        %v2059 = vpop.f32.mrf.mxu0
        %v2060 = vadd.f32 %v1947, %v2059
        %2061 = vmatmul.f32.gmra.mxu0 %v1522
        %v2062 = vpop.f32.mrf.mxu0
        %v2063 = vadd.f32 %v1950, %v2062
        %2064 = vmatmul.f32.gmra.mxu0 %v1526
        %v2065 = vpop.f32.mrf.mxu0
        %v2066 = vadd.f32 %v1953, %v2065
        %2067 = vmatmul.f32.gmra.mxu0 %v1530
        %v2068 = vpop.f32.mrf.mxu0
        %v2069 = vadd.f32 %v1956, %v2068
        %2070 = vmatmul.f32.gmra.mxu0 %v1534
        %v2071 = vpop.f32.mrf.mxu0
        %v2072 = vadd.f32 %v1959, %v2071
        %2073 = vmatmul.f32.gmra.mxu0 %v1538
        %v2074 = vpop.f32.mrf.mxu0
        %v2075 = vadd.f32 %v1962, %v2074
        %2076 = vmatmul.f32.gmra.mxu0 %v1542
        %v2077 = vpop.f32.mrf.mxu0
        %v2078 = vadd.f32 %v1965, %v2077
        %2079 = vmatmul.f32.gmra.mxu0 %v1546
        %v2080 = vpop.f32.mrf.mxu0
        %v2081 = vadd.f32 %v1968, %v2080
        %2082 = vmatmul.f32.gmra.mxu0 %v1550
        %v2083 = vpop.f32.mrf.mxu0
        %v2084 = vadd.f32 %v1971, %v2083
        %2085 = vmatmul.f32.gmra.mxu0 %v1554
        %v2086 = vpop.f32.mrf.mxu0
        %v2087 = vadd.f32 %v1974, %v2086
        %2088 = vmatmul.f32.gmra.mxu0 %v1558
        %v2089 = vpop.f32.mrf.mxu0
        %v2090 = vadd.f32 %v1977, %v2089
        %2091 = vmatmul.f32.gmra.mxu0 %v1562
        %v2092 = vpop.f32.mrf.mxu0
        %v2093 = vadd.f32 %v1980, %v2092
        %2094 = vdwg.mxu0
        %2095 = vmatpush.msra.mxu0 %v1434
        %2096 = vmatpush.msra.mxu0 %v1432
        %2097 = vmatpush.msra.mxu0 %v1430
        %2098 = vmatpush.msra.mxu0 %v1428
        %2099 = vmatpush.msra.mxu0 %v1426
        %2100 = vmatpush.msra.mxu0 %v1424
        %2101 = vmatpush.msra.mxu0 %v1422
        %2102 = vmatpush.msra.mxu0 %v1420
        %2103 = vmatpush.msra.mxu0 %v1418
        %2104 = vmatpush.msra.mxu0 %v1416
        %2105 = vmatpush.msra.mxu0 %v1414
        %2106 = vmatpush.msra.mxu0 %v1412
        %2107 = vmatpush.msra.mxu0 %v1410
        %2108 = vmatpush.msra.mxu0 %v1408
        %2109 = vmatpush.msra.mxu0 %v1406
        %2110 = vmatpush.msra.mxu0 %v1404
        %2111 = vmatmul.f32.gmra.mxu0 %v1439
        %v2112 = vpop.f32.mrf.mxu0
        %v2113 = vadd.f32 %v2000, %v2112
        %2114 = vmatmul.f32.gmra.mxu0 %v1443
        %v2115 = vpop.f32.mrf.mxu0
        %v2116 = vadd.f32 %v2003, %v2115
        %2117 = vmatmul.f32.gmra.mxu0 %v1447
        %v2118 = vpop.f32.mrf.mxu0
        %v2119 = vadd.f32 %v2006, %v2118
        %2120 = vmatmul.f32.gmra.mxu0 %v1451
        %v2121 = vpop.f32.mrf.mxu0
        %v2122 = vadd.f32 %v2009, %v2121
        %2123 = vmatmul.f32.gmra.mxu0 %v1455
        %v2124 = vpop.f32.mrf.mxu0
        %v2125 = vadd.f32 %v2012, %v2124
        %2126 = vmatmul.f32.gmra.mxu0 %v1459
        %v2127 = vpop.f32.mrf.mxu0
        %v2128 = vadd.f32 %v2015, %v2127
        %2129 = vmatmul.f32.gmra.mxu0 %v1463
        %v2130 = vpop.f32.mrf.mxu0
        %v2131 = vadd.f32 %v2018, %v2130
        %2132 = vmatmul.f32.gmra.mxu0 %v1467
        %v2133 = vpop.f32.mrf.mxu0
        %v2134 = vadd.f32 %v2021, %v2133
        %2135 = vmatmul.f32.gmra.mxu0 %v1471
        %v2136 = vpop.f32.mrf.mxu0
        %v2137 = vadd.f32 %v2024, %v2136
        %2138 = vmatmul.f32.gmra.mxu0 %v1475
        %v2139 = vpop.f32.mrf.mxu0
        %v2140 = vadd.f32 %v2027, %v2139
        %2141 = vmatmul.f32.gmra.mxu0 %v1479
        %v2142 = vpop.f32.mrf.mxu0
        %v2143 = vadd.f32 %v2030, %v2142
        %2144 = vmatmul.f32.gmra.mxu0 %v1483
        %v2145 = vpop.f32.mrf.mxu0
        %v2146 = vadd.f32 %v2033, %v2145
        %2147 = vmatmul.f32.gmra.mxu0 %v1487
        %v2148 = vpop.f32.mrf.mxu0
        %v2149 = vadd.f32 %v2036, %v2148
        %2150 = vmatmul.f32.gmra.mxu0 %v1491
        %v2151 = vpop.f32.mrf.mxu0
        %v2152 = vadd.f32 %v2039, %v2151
        %2153 = vmatmul.f32.gmra.mxu0 %v1495
        %v2154 = vpop.f32.mrf.mxu0
        %v2155 = vadd.f32 %v2042, %v2154
        %2156 = vmatmul.f32.gmra.mxu0 %v1499
        %v2157 = vpop.f32.mrf.mxu0
        %v2158 = vadd.f32 %v2045, %v2157
        %2159 = vmatmul.f32.gmra.mxu0 %v1503
        %v2160 = vpop.f32.mrf.mxu0
        %v2161 = vadd.f32 %v2048, %v2160
        %2162 = vmatmul.f32.gmra.mxu0 %v1507
        %v2163 = vpop.f32.mrf.mxu0
        %v2164 = vadd.f32 %v2051, %v2163
        %2165 = vmatmul.f32.gmra.mxu0 %v1511
        %v2166 = vpop.f32.mrf.mxu0
        %v2167 = vadd.f32 %v2054, %v2166
        %2168 = vmatmul.f32.gmra.mxu0 %v1515
        %v2169 = vpop.f32.mrf.mxu0
        %v2170 = vadd.f32 %v2057, %v2169
        %2171 = vmatmul.f32.gmra.mxu0 %v1519
        %v2172 = vpop.f32.mrf.mxu0
        %v2173 = vadd.f32 %v2060, %v2172
        %2174 = vmatmul.f32.gmra.mxu0 %v1523
        %v2175 = vpop.f32.mrf.mxu0
        %v2176 = vadd.f32 %v2063, %v2175
        %2177 = vmatmul.f32.gmra.mxu0 %v1527
        %v2178 = vpop.f32.mrf.mxu0
        %v2179 = vadd.f32 %v2066, %v2178
        %2180 = vmatmul.f32.gmra.mxu0 %v1531
        %v2181 = vpop.f32.mrf.mxu0
        %v2182 = vadd.f32 %v2069, %v2181
        %2183 = vmatmul.f32.gmra.mxu0 %v1535
        %v2184 = vpop.f32.mrf.mxu0
        %v2185 = vadd.f32 %v2072, %v2184
        %2186 = vmatmul.f32.gmra.mxu0 %v1539
        %v2187 = vpop.f32.mrf.mxu0
        %v2188 = vadd.f32 %v2075, %v2187
        %2189 = vmatmul.f32.gmra.mxu0 %v1543
        %v2190 = vpop.f32.mrf.mxu0
        %v2191 = vadd.f32 %v2078, %v2190
        %2192 = vmatmul.f32.gmra.mxu0 %v1547
        %v2193 = vpop.f32.mrf.mxu0
        %v2194 = vadd.f32 %v2081, %v2193
        %2195 = vmatmul.f32.gmra.mxu0 %v1551
        %v2196 = vpop.f32.mrf.mxu0
        %v2197 = vadd.f32 %v2084, %v2196
        %2198 = vmatmul.f32.gmra.mxu0 %v1555
        %v2199 = vpop.f32.mrf.mxu0
        %v2200 = vadd.f32 %v2087, %v2199
        %2201 = vmatmul.f32.gmra.mxu0 %v1559
        %v2202 = vpop.f32.mrf.mxu0
        %v2203 = vadd.f32 %v2090, %v2202
        %2204 = vmatmul.f32.gmra.mxu0 %v1563
        %v2205 = vpop.f32.mrf.mxu0
        %v2206 = vadd.f32 %v2093, %v2205
        %2207 = vdwg.mxu0
        %2208 = vmatpush.msra.mxu0 %v1339
        %2209 = vmatpush.msra.mxu0 %v1337
        %2210 = vmatpush.msra.mxu0 %v1335
        %2211 = vmatpush.msra.mxu0 %v1333
        %2212 = vmatpush.msra.mxu0 %v1331
        %2213 = vmatpush.msra.mxu0 %v1329
        %2214 = vmatpush.msra.mxu0 %v1327
        %2215 = vmatpush.msra.mxu0 %v1325
        %2216 = vmatpush.msra.mxu0 %v1323
        %2217 = vmatpush.msra.mxu0 %v1321
        %2218 = vmatpush.msra.mxu0 %v1319
        %2219 = vmatpush.msra.mxu0 %v1317
        %2220 = vmatpush.msra.mxu0 %v1315
        %2221 = vmatpush.msra.mxu0 %v1313
        %2222 = vmatpush.msra.mxu0 %v1311
        %2223 = vmatpush.msra.mxu0 %v1309
        %2224 = vmatmul.f32.gmra.mxu0 %v1436
        %v2225 = vpop.f32.mrf.mxu0
        %v2226 = vadd.f32 %v1599, %v2225
        %2227 = vmatmul.f32.gmra.mxu0 %v1440
        %v2228 = vpop.f32.mrf.mxu0
        %v2229 = vadd.f32 %v1604, %v2228
        %2230 = vmatmul.f32.gmra.mxu0 %v1444
        %v2231 = vpop.f32.mrf.mxu0
        %v2232 = vadd.f32 %v1609, %v2231
        %2233 = vmatmul.f32.gmra.mxu0 %v1448
        %v2234 = vpop.f32.mrf.mxu0
        %v2235 = vadd.f32 %v1614, %v2234
        %2236 = vmatmul.f32.gmra.mxu0 %v1452
        %v2237 = vpop.f32.mrf.mxu0
        %v2238 = vadd.f32 %v1619, %v2237
        %2239 = vmatmul.f32.gmra.mxu0 %v1456
        %v2240 = vpop.f32.mrf.mxu0
        %v2241 = vadd.f32 %v1624, %v2240
        %2242 = vmatmul.f32.gmra.mxu0 %v1460
        %v2243 = vpop.f32.mrf.mxu0
        %v2244 = vadd.f32 %v1629, %v2243
        %2245 = vmatmul.f32.gmra.mxu0 %v1464
        %v2246 = vpop.f32.mrf.mxu0
        %v2247 = vadd.f32 %v1634, %v2246
        %2248 = vmatmul.f32.gmra.mxu0 %v1468
        %v2249 = vpop.f32.mrf.mxu0
        %v2250 = vadd.f32 %v1639, %v2249
        %2251 = vmatmul.f32.gmra.mxu0 %v1472
        %v2252 = vpop.f32.mrf.mxu0
        %v2253 = vadd.f32 %v1644, %v2252
        %2254 = vmatmul.f32.gmra.mxu0 %v1476
        %v2255 = vpop.f32.mrf.mxu0
        %v2256 = vadd.f32 %v1649, %v2255
        %2257 = vmatmul.f32.gmra.mxu0 %v1480
        %v2258 = vpop.f32.mrf.mxu0
        %v2259 = vadd.f32 %v1654, %v2258
        %2260 = vmatmul.f32.gmra.mxu0 %v1484
        %v2261 = vpop.f32.mrf.mxu0
        %v2262 = vadd.f32 %v1659, %v2261
        %2263 = vmatmul.f32.gmra.mxu0 %v1488
        %v2264 = vpop.f32.mrf.mxu0
        %v2265 = vadd.f32 %v1664, %v2264
        %2266 = vmatmul.f32.gmra.mxu0 %v1492
        %v2267 = vpop.f32.mrf.mxu0
        %v2268 = vadd.f32 %v1669, %v2267
        %2269 = vmatmul.f32.gmra.mxu0 %v1496
        %v2270 = vpop.f32.mrf.mxu0
        %v2271 = vadd.f32 %v1674, %v2270
        %2272 = vmatmul.f32.gmra.mxu0 %v1500
        %v2273 = vpop.f32.mrf.mxu0
        %v2274 = vadd.f32 %v1679, %v2273
        %2275 = vmatmul.f32.gmra.mxu0 %v1504
        %v2276 = vpop.f32.mrf.mxu0
        %v2277 = vadd.f32 %v1684, %v2276
        %2278 = vmatmul.f32.gmra.mxu0 %v1508
        %v2279 = vpop.f32.mrf.mxu0
        %v2280 = vadd.f32 %v1689, %v2279
        %2281 = vmatmul.f32.gmra.mxu0 %v1512
        %v2282 = vpop.f32.mrf.mxu0
        %v2283 = vadd.f32 %v1694, %v2282
        %2284 = vmatmul.f32.gmra.mxu0 %v1516
        %v2285 = vpop.f32.mrf.mxu0
        %v2286 = vadd.f32 %v1699, %v2285
        %2287 = vmatmul.f32.gmra.mxu0 %v1520
        %v2288 = vpop.f32.mrf.mxu0
        %v2289 = vadd.f32 %v1704, %v2288
        %2290 = vmatmul.f32.gmra.mxu0 %v1524
        %v2291 = vpop.f32.mrf.mxu0
        %v2292 = vadd.f32 %v1709, %v2291
        %2293 = vmatmul.f32.gmra.mxu0 %v1528
        %v2294 = vpop.f32.mrf.mxu0
        %v2295 = vadd.f32 %v1714, %v2294
        %2296 = vmatmul.f32.gmra.mxu0 %v1532
        %v2297 = vpop.f32.mrf.mxu0
        %v2298 = vadd.f32 %v1719, %v2297
        %2299 = vmatmul.f32.gmra.mxu0 %v1536
        %v2300 = vpop.f32.mrf.mxu0
        %v2301 = vadd.f32 %v1724, %v2300
        %2302 = vmatmul.f32.gmra.mxu0 %v1540
        %v2303 = vpop.f32.mrf.mxu0
        %v2304 = vadd.f32 %v1729, %v2303
        %2305 = vmatmul.f32.gmra.mxu0 %v1544
        %v2306 = vpop.f32.mrf.mxu0
        %v2307 = vadd.f32 %v1734, %v2306
        %2308 = vmatmul.f32.gmra.mxu0 %v1548
        %v2309 = vpop.f32.mrf.mxu0
        %v2310 = vadd.f32 %v1739, %v2309
        %2311 = vmatmul.f32.gmra.mxu0 %v1552
        %v2312 = vpop.f32.mrf.mxu0
        %v2313 = vadd.f32 %v1744, %v2312
        %2314 = vmatmul.f32.gmra.mxu0 %v1556
        %v2315 = vpop.f32.mrf.mxu0
        %v2316 = vadd.f32 %v1749, %v2315
        %2317 = vmatmul.f32.gmra.mxu0 %v1560
        %v2318 = vpop.f32.mrf.mxu0
        %v2319 = vadd.f32 %v1754, %v2318
        %2320 = vdwg.mxu0
        %2321 = vmatpush.msra.mxu0 %v1371
        %2322 = vmatpush.msra.mxu0 %v1369
        %2323 = vmatpush.msra.mxu0 %v1367
        %2324 = vmatpush.msra.mxu0 %v1365
        %2325 = vmatpush.msra.mxu0 %v1363
        %2326 = vmatpush.msra.mxu0 %v1361
        %2327 = vmatpush.msra.mxu0 %v1359
        %2328 = vmatpush.msra.mxu0 %v1357
        %2329 = vmatpush.msra.mxu0 %v1355
        %2330 = vmatpush.msra.mxu0 %v1353
        %2331 = vmatpush.msra.mxu0 %v1351
        %2332 = vmatpush.msra.mxu0 %v1349
        %2333 = vmatpush.msra.mxu0 %v1347
        %2334 = vmatpush.msra.mxu0 %v1345
        %2335 = vmatpush.msra.mxu0 %v1343
        %2336 = vmatpush.msra.mxu0 %v1341
        %2337 = vmatmul.f32.gmra.mxu0 %v1437
        %v2338 = vpop.f32.mrf.mxu0
        %v2339 = vadd.f32 %v2226, %v2338
        %2340 = vmatmul.f32.gmra.mxu0 %v1441
        %v2341 = vpop.f32.mrf.mxu0
        %v2342 = vadd.f32 %v2229, %v2341
        %2343 = vmatmul.f32.gmra.mxu0 %v1445
        %v2344 = vpop.f32.mrf.mxu0
        %v2345 = vadd.f32 %v2232, %v2344
        %2346 = vmatmul.f32.gmra.mxu0 %v1449
        %v2347 = vpop.f32.mrf.mxu0
        %v2348 = vadd.f32 %v2235, %v2347
        %2349 = vmatmul.f32.gmra.mxu0 %v1453
        %v2350 = vpop.f32.mrf.mxu0
        %v2351 = vadd.f32 %v2238, %v2350
        %2352 = vmatmul.f32.gmra.mxu0 %v1457
        %v2353 = vpop.f32.mrf.mxu0
        %v2354 = vadd.f32 %v2241, %v2353
        %2355 = vmatmul.f32.gmra.mxu0 %v1461
        %v2356 = vpop.f32.mrf.mxu0
        %v2357 = vadd.f32 %v2244, %v2356
        %2358 = vmatmul.f32.gmra.mxu0 %v1465
        %v2359 = vpop.f32.mrf.mxu0
        %v2360 = vadd.f32 %v2247, %v2359
        %2361 = vmatmul.f32.gmra.mxu0 %v1469
        %v2362 = vpop.f32.mrf.mxu0
        %v2363 = vadd.f32 %v2250, %v2362
        %2364 = vmatmul.f32.gmra.mxu0 %v1473
        %v2365 = vpop.f32.mrf.mxu0
        %v2366 = vadd.f32 %v2253, %v2365
        %2367 = vmatmul.f32.gmra.mxu0 %v1477
        %v2368 = vpop.f32.mrf.mxu0
        %v2369 = vadd.f32 %v2256, %v2368
        %2370 = vmatmul.f32.gmra.mxu0 %v1481
        %v2371 = vpop.f32.mrf.mxu0
        %v2372 = vadd.f32 %v2259, %v2371
        %2373 = vmatmul.f32.gmra.mxu0 %v1485
        %v2374 = vpop.f32.mrf.mxu0
        %v2375 = vadd.f32 %v2262, %v2374
        %2376 = vmatmul.f32.gmra.mxu0 %v1489
        %v2377 = vpop.f32.mrf.mxu0
        %v2378 = vadd.f32 %v2265, %v2377
        %2379 = vmatmul.f32.gmra.mxu0 %v1493
        %v2380 = vpop.f32.mrf.mxu0
        %v2381 = vadd.f32 %v2268, %v2380
        %2382 = vmatmul.f32.gmra.mxu0 %v1497
        %v2383 = vpop.f32.mrf.mxu0
        %v2384 = vadd.f32 %v2271, %v2383
        %2385 = vmatmul.f32.gmra.mxu0 %v1501
        %v2386 = vpop.f32.mrf.mxu0
        %v2387 = vadd.f32 %v2274, %v2386
        %2388 = vmatmul.f32.gmra.mxu0 %v1505
        %v2389 = vpop.f32.mrf.mxu0
        %v2390 = vadd.f32 %v2277, %v2389
        %2391 = vmatmul.f32.gmra.mxu0 %v1509
        %v2392 = vpop.f32.mrf.mxu0
        %v2393 = vadd.f32 %v2280, %v2392
        %2394 = vmatmul.f32.gmra.mxu0 %v1513
        %v2395 = vpop.f32.mrf.mxu0
        %v2396 = vadd.f32 %v2283, %v2395
        %2397 = vmatmul.f32.gmra.mxu0 %v1517
        %v2398 = vpop.f32.mrf.mxu0
        %v2399 = vadd.f32 %v2286, %v2398
        %2400 = vmatmul.f32.gmra.mxu0 %v1521
        %v2401 = vpop.f32.mrf.mxu0
        %v2402 = vadd.f32 %v2289, %v2401
        %2403 = vmatmul.f32.gmra.mxu0 %v1525
        %v2404 = vpop.f32.mrf.mxu0
        %v2405 = vadd.f32 %v2292, %v2404
        %2406 = vmatmul.f32.gmra.mxu0 %v1529
        %v2407 = vpop.f32.mrf.mxu0
        %v2408 = vadd.f32 %v2295, %v2407
        %2409 = vmatmul.f32.gmra.mxu0 %v1533
        %v2410 = vpop.f32.mrf.mxu0
        %v2411 = vadd.f32 %v2298, %v2410
        %2412 = vmatmul.f32.gmra.mxu0 %v1537
        %v2413 = vpop.f32.mrf.mxu0
        %v2414 = vadd.f32 %v2301, %v2413
        %2415 = vmatmul.f32.gmra.mxu0 %v1541
        %v2416 = vpop.f32.mrf.mxu0
        %v2417 = vadd.f32 %v2304, %v2416
        %2418 = vmatmul.f32.gmra.mxu0 %v1545
        %v2419 = vpop.f32.mrf.mxu0
        %v2420 = vadd.f32 %v2307, %v2419
        %2421 = vmatmul.f32.gmra.mxu0 %v1549
        %v2422 = vpop.f32.mrf.mxu0
        %v2423 = vadd.f32 %v2310, %v2422
        %2424 = vmatmul.f32.gmra.mxu0 %v1553
        %v2425 = vpop.f32.mrf.mxu0
        %v2426 = vadd.f32 %v2313, %v2425
        %2427 = vmatmul.f32.gmra.mxu0 %v1557
        %v2428 = vpop.f32.mrf.mxu0
        %v2429 = vadd.f32 %v2316, %v2428
        %2430 = vmatmul.f32.gmra.mxu0 %v1561
        %v2431 = vpop.f32.mrf.mxu0
        %v2432 = vadd.f32 %v2319, %v2431
        %2433 = vdwg.mxu0
        %2434 = vmatpush.msra.mxu0 %v1403
        %2435 = vmatpush.msra.mxu0 %v1401
        %2436 = vmatpush.msra.mxu0 %v1399
        %2437 = vmatpush.msra.mxu0 %v1397
        %2438 = vmatpush.msra.mxu0 %v1395
        %2439 = vmatpush.msra.mxu0 %v1393
        %2440 = vmatpush.msra.mxu0 %v1391
        %2441 = vmatpush.msra.mxu0 %v1389
        %2442 = vmatpush.msra.mxu0 %v1387
        %2443 = vmatpush.msra.mxu0 %v1385
        %2444 = vmatpush.msra.mxu0 %v1383
        %2445 = vmatpush.msra.mxu0 %v1381
        %2446 = vmatpush.msra.mxu0 %v1379
        %2447 = vmatpush.msra.mxu0 %v1377
        %2448 = vmatpush.msra.mxu0 %v1375
        %2449 = vmatpush.msra.mxu0 %v1373
        %2450 = vmatmul.f32.gmra.mxu0 %v1438
        %v2451 = vpop.f32.mrf.mxu0
        %v2452 = vadd.f32 %v2339, %v2451
        %2453 = vmatmul.f32.gmra.mxu0 %v1442
        %v2454 = vpop.f32.mrf.mxu0
        %v2455 = vadd.f32 %v2342, %v2454
        %2456 = vmatmul.f32.gmra.mxu0 %v1446
        %v2457 = vpop.f32.mrf.mxu0
        %v2458 = vadd.f32 %v2345, %v2457
        %2459 = vmatmul.f32.gmra.mxu0 %v1450
        %v2460 = vpop.f32.mrf.mxu0
        %v2461 = vadd.f32 %v2348, %v2460
        %2462 = vmatmul.f32.gmra.mxu0 %v1454
        %v2463 = vpop.f32.mrf.mxu0
        %v2464 = vadd.f32 %v2351, %v2463
        %2465 = vmatmul.f32.gmra.mxu0 %v1458
        %v2466 = vpop.f32.mrf.mxu0
        %v2467 = vadd.f32 %v2354, %v2466
        %2468 = vmatmul.f32.gmra.mxu0 %v1462
        %v2469 = vpop.f32.mrf.mxu0
        %v2470 = vadd.f32 %v2357, %v2469
        %2471 = vmatmul.f32.gmra.mxu0 %v1466
        %v2472 = vpop.f32.mrf.mxu0
        %v2473 = vadd.f32 %v2360, %v2472
        %2474 = vmatmul.f32.gmra.mxu0 %v1470
        %v2475 = vpop.f32.mrf.mxu0
        %v2476 = vadd.f32 %v2363, %v2475
        %2477 = vmatmul.f32.gmra.mxu0 %v1474
        %v2478 = vpop.f32.mrf.mxu0
        %v2479 = vadd.f32 %v2366, %v2478
        %2480 = vmatmul.f32.gmra.mxu0 %v1478
        %v2481 = vpop.f32.mrf.mxu0
        %v2482 = vadd.f32 %v2369, %v2481
        %2483 = vmatmul.f32.gmra.mxu0 %v1482
        %v2484 = vpop.f32.mrf.mxu0
        %v2485 = vadd.f32 %v2372, %v2484
        %2486 = vmatmul.f32.gmra.mxu0 %v1486
        %v2487 = vpop.f32.mrf.mxu0
        %v2488 = vadd.f32 %v2375, %v2487
        %2489 = vmatmul.f32.gmra.mxu0 %v1490
        %v2490 = vpop.f32.mrf.mxu0
        %v2491 = vadd.f32 %v2378, %v2490
        %2492 = vmatmul.f32.gmra.mxu0 %v1494
        %v2493 = vpop.f32.mrf.mxu0
        %v2494 = vadd.f32 %v2381, %v2493
        %2495 = vmatmul.f32.gmra.mxu0 %v1498
        %v2496 = vpop.f32.mrf.mxu0
        %v2497 = vadd.f32 %v2384, %v2496
        %2498 = vmatmul.f32.gmra.mxu0 %v1502
        %v2499 = vpop.f32.mrf.mxu0
        %v2500 = vadd.f32 %v2387, %v2499
        %2501 = vmatmul.f32.gmra.mxu0 %v1506
        %v2502 = vpop.f32.mrf.mxu0
        %v2503 = vadd.f32 %v2390, %v2502
        %2504 = vmatmul.f32.gmra.mxu0 %v1510
        %v2505 = vpop.f32.mrf.mxu0
        %v2506 = vadd.f32 %v2393, %v2505
        %2507 = vmatmul.f32.gmra.mxu0 %v1514
        %v2508 = vpop.f32.mrf.mxu0
        %v2509 = vadd.f32 %v2396, %v2508
        %2510 = vmatmul.f32.gmra.mxu0 %v1518
        %v2511 = vpop.f32.mrf.mxu0
        %v2512 = vadd.f32 %v2399, %v2511
        %2513 = vmatmul.f32.gmra.mxu0 %v1522
        %v2514 = vpop.f32.mrf.mxu0
        %v2515 = vadd.f32 %v2402, %v2514
        %2516 = vmatmul.f32.gmra.mxu0 %v1526
        %v2517 = vpop.f32.mrf.mxu0
        %v2518 = vadd.f32 %v2405, %v2517
        %2519 = vmatmul.f32.gmra.mxu0 %v1530
        %v2520 = vpop.f32.mrf.mxu0
        %v2521 = vadd.f32 %v2408, %v2520
        %2522 = vmatmul.f32.gmra.mxu0 %v1534
        %v2523 = vpop.f32.mrf.mxu0
        %v2524 = vadd.f32 %v2411, %v2523
        %2525 = vmatmul.f32.gmra.mxu0 %v1538
        %v2526 = vpop.f32.mrf.mxu0
        %v2527 = vadd.f32 %v2414, %v2526
        %2528 = vmatmul.f32.gmra.mxu0 %v1542
        %v2529 = vpop.f32.mrf.mxu0
        %v2530 = vadd.f32 %v2417, %v2529
        %2531 = vmatmul.f32.gmra.mxu0 %v1546
        %v2532 = vpop.f32.mrf.mxu0
        %v2533 = vadd.f32 %v2420, %v2532
        %2534 = vmatmul.f32.gmra.mxu0 %v1550
        %v2535 = vpop.f32.mrf.mxu0
        %v2536 = vadd.f32 %v2423, %v2535
        %2537 = vmatmul.f32.gmra.mxu0 %v1554
        %v2538 = vpop.f32.mrf.mxu0
        %v2539 = vadd.f32 %v2426, %v2538
        %2540 = vmatmul.f32.gmra.mxu0 %v1558
        %v2541 = vpop.f32.mrf.mxu0
        %v2542 = vadd.f32 %v2429, %v2541
        %2543 = vmatmul.f32.gmra.mxu0 %v1562
        %v2544 = vpop.f32.mrf.mxu0
        %v2545 = vadd.f32 %v2432, %v2544
        %2546 = vdwg.mxu0
        %2547 = vmatpush.msra.mxu0 %v1435
        %2548 = vmatpush.msra.mxu0 %v1433
        %2549 = vmatpush.msra.mxu0 %v1431
        %2550 = vmatpush.msra.mxu0 %v1429
        %2551 = vmatpush.msra.mxu0 %v1427
        %2552 = vmatpush.msra.mxu0 %v1425
        %2553 = vmatpush.msra.mxu0 %v1423
        %2554 = vmatpush.msra.mxu0 %v1421
        %2555 = vmatpush.msra.mxu0 %v1419
        %2556 = vmatpush.msra.mxu0 %v1417
        %2557 = vmatpush.msra.mxu0 %v1415
        %2558 = vmatpush.msra.mxu0 %v1413
        %2559 = vmatpush.msra.mxu0 %v1411
        %2560 = vmatpush.msra.mxu0 %v1409
        %2561 = vmatpush.msra.mxu0 %v1407
        %2562 = vmatpush.msra.mxu0 %v1405
        %2563 = vmatmul.f32.gmra.mxu0 %v1439
        %v2564 = vpop.f32.mrf.mxu0
        %v2565 = vadd.f32 %v2452, %v2564
        %2566 = vmatmul.f32.gmra.mxu0 %v1443
        %v2567 = vpop.f32.mrf.mxu0
        %v2568 = vadd.f32 %v2455, %v2567
        %2569 = vmatmul.f32.gmra.mxu0 %v1447
        %v2570 = vpop.f32.mrf.mxu0
        %v2571 = vadd.f32 %v2458, %v2570
        %2572 = vmatmul.f32.gmra.mxu0 %v1451
        %v2573 = vpop.f32.mrf.mxu0
        %v2574 = vadd.f32 %v2461, %v2573
        %2575 = vmatmul.f32.gmra.mxu0 %v1455
        %v2576 = vpop.f32.mrf.mxu0
        %v2577 = vadd.f32 %v2464, %v2576
        %2578 = vmatmul.f32.gmra.mxu0 %v1459
        %v2579 = vpop.f32.mrf.mxu0
        %v2580 = vadd.f32 %v2467, %v2579
        %2581 = vmatmul.f32.gmra.mxu0 %v1463
        %v2582 = vpop.f32.mrf.mxu0
        %v2583 = vadd.f32 %v2470, %v2582
        %2584 = vmatmul.f32.gmra.mxu0 %v1467
        %v2585 = vpop.f32.mrf.mxu0
        %v2586 = vadd.f32 %v2473, %v2585
        %2587 = vmatmul.f32.gmra.mxu0 %v1471
        %v2588 = vpop.f32.mrf.mxu0
        %v2589 = vadd.f32 %v2476, %v2588
        %2590 = vmatmul.f32.gmra.mxu0 %v1475
        %v2591 = vpop.f32.mrf.mxu0
        %v2592 = vadd.f32 %v2479, %v2591
        %2593 = vmatmul.f32.gmra.mxu0 %v1479
        %v2594 = vpop.f32.mrf.mxu0
        %v2595 = vadd.f32 %v2482, %v2594
        %2596 = vmatmul.f32.gmra.mxu0 %v1483
        %v2597 = vpop.f32.mrf.mxu0
        %v2598 = vadd.f32 %v2485, %v2597
        %2599 = vmatmul.f32.gmra.mxu0 %v1487
        %v2600 = vpop.f32.mrf.mxu0
        %v2601 = vadd.f32 %v2488, %v2600
        %2602 = vmatmul.f32.gmra.mxu0 %v1491
        %v2603 = vpop.f32.mrf.mxu0
        %v2604 = vadd.f32 %v2491, %v2603
        %2605 = vmatmul.f32.gmra.mxu0 %v1495
        %v2606 = vpop.f32.mrf.mxu0
        %v2607 = vadd.f32 %v2494, %v2606
        %2608 = vmatmul.f32.gmra.mxu0 %v1499
        %v2609 = vpop.f32.mrf.mxu0
        %v2610 = vadd.f32 %v2497, %v2609
        %2611 = vmatmul.f32.gmra.mxu0 %v1503
        %v2612 = vpop.f32.mrf.mxu0
        %v2613 = vadd.f32 %v2500, %v2612
        %2614 = vmatmul.f32.gmra.mxu0 %v1507
        %v2615 = vpop.f32.mrf.mxu0
        %v2616 = vadd.f32 %v2503, %v2615
        %2617 = vmatmul.f32.gmra.mxu0 %v1511
        %v2618 = vpop.f32.mrf.mxu0
        %v2619 = vadd.f32 %v2506, %v2618
        %2620 = vmatmul.f32.gmra.mxu0 %v1515
        %v2621 = vpop.f32.mrf.mxu0
        %v2622 = vadd.f32 %v2509, %v2621
        %2623 = vmatmul.f32.gmra.mxu0 %v1519
        %v2624 = vpop.f32.mrf.mxu0
        %v2625 = vadd.f32 %v2512, %v2624
        %2626 = vmatmul.f32.gmra.mxu0 %v1523
        %v2627 = vpop.f32.mrf.mxu0
        %v2628 = vadd.f32 %v2515, %v2627
        %2629 = vmatmul.f32.gmra.mxu0 %v1527
        %v2630 = vpop.f32.mrf.mxu0
        %v2631 = vadd.f32 %v2518, %v2630
        %2632 = vmatmul.f32.gmra.mxu0 %v1531
        %v2633 = vpop.f32.mrf.mxu0
        %v2634 = vadd.f32 %v2521, %v2633
        %2635 = vmatmul.f32.gmra.mxu0 %v1535
        %v2636 = vpop.f32.mrf.mxu0
        %v2637 = vadd.f32 %v2524, %v2636
        %2638 = vmatmul.f32.gmra.mxu0 %v1539
        %v2639 = vpop.f32.mrf.mxu0
        %v2640 = vadd.f32 %v2527, %v2639
        %2641 = vmatmul.f32.gmra.mxu0 %v1543
        %v2642 = vpop.f32.mrf.mxu0
        %v2643 = vadd.f32 %v2530, %v2642
        %2644 = vmatmul.f32.gmra.mxu0 %v1547
        %v2645 = vpop.f32.mrf.mxu0
        %v2646 = vadd.f32 %v2533, %v2645
        %2647 = vmatmul.f32.gmra.mxu0 %v1551
        %v2648 = vpop.f32.mrf.mxu0
        %v2649 = vadd.f32 %v2536, %v2648
        %2650 = vmatmul.f32.gmra.mxu0 %v1555
        %v2651 = vpop.f32.mrf.mxu0
        %v2652 = vadd.f32 %v2539, %v2651
        %2653 = vmatmul.f32.gmra.mxu0 %v1559
        %v2654 = vpop.f32.mrf.mxu0
        %v2655 = vadd.f32 %v2542, %v2654
        %2656 = vmatmul.f32.gmra.mxu0 %v1563
        %v2657 = vpop.f32.mrf.mxu0
        %v2658 = vadd.f32 %v2545, %v2657
        %2659 = vdwg.mxu0
        %v2660 = vmax.f32 %v2113, 0.0
        %v2661 = vmax.f32 %v2565, 0.0
        %v2662 = vmax.f32 %v2116, 0.0
        %v2663 = vmax.f32 %v2568, 0.0
        %v2664 = vmax.f32 %v2119, 0.0
        %v2665 = vmax.f32 %v2571, 0.0
        %v2666 = vmax.f32 %v2122, 0.0
        %v2667 = vmax.f32 %v2574, 0.0
        %v2668 = vmax.f32 %v2125, 0.0
        %v2669 = vmax.f32 %v2577, 0.0
        %v2670 = vmax.f32 %v2128, 0.0
        %v2671 = vmax.f32 %v2580, 0.0
        %v2672 = vmax.f32 %v2131, 0.0
        %v2673 = vmax.f32 %v2583, 0.0
        %v2674 = vmax.f32 %v2134, 0.0
        %v2675 = vmax.f32 %v2586, 0.0
        %v2676 = vmax.f32 %v2137, 0.0
        %v2677 = vmax.f32 %v2589, 0.0
        %v2678 = vmax.f32 %v2140, 0.0
        %v2679 = vmax.f32 %v2592, 0.0
        %v2680 = vmax.f32 %v2143, 0.0
        %v2681 = vmax.f32 %v2595, 0.0
        %v2682 = vmax.f32 %v2146, 0.0
        %v2683 = vmax.f32 %v2598, 0.0
        %v2684 = vmax.f32 %v2149, 0.0
        %v2685 = vmax.f32 %v2601, 0.0
        %v2686 = vmax.f32 %v2152, 0.0
        %v2687 = vmax.f32 %v2604, 0.0
        %v2688 = vmax.f32 %v2155, 0.0
        %v2689 = vmax.f32 %v2607, 0.0
        %v2690 = vmax.f32 %v2158, 0.0
        %v2691 = vmax.f32 %v2610, 0.0
        %v2692 = vmax.f32 %v2161, 0.0
        %v2693 = vmax.f32 %v2613, 0.0
        %v2694 = vmax.f32 %v2164, 0.0
        %v2695 = vmax.f32 %v2616, 0.0
        %v2696 = vmax.f32 %v2167, 0.0
        %v2697 = vmax.f32 %v2619, 0.0
        %v2698 = vmax.f32 %v2170, 0.0
        %v2699 = vmax.f32 %v2622, 0.0
        %v2700 = vmax.f32 %v2173, 0.0
        %v2701 = vmax.f32 %v2625, 0.0
        %v2702 = vmax.f32 %v2176, 0.0
        %v2703 = vmax.f32 %v2628, 0.0
        %v2704 = vmax.f32 %v2179, 0.0
        %v2705 = vmax.f32 %v2631, 0.0
        %v2706 = vmax.f32 %v2182, 0.0
        %v2707 = vmax.f32 %v2634, 0.0
        %v2708 = vmax.f32 %v2185, 0.0
        %v2709 = vmax.f32 %v2637, 0.0
        %v2710 = vmax.f32 %v2188, 0.0
        %v2711 = vmax.f32 %v2640, 0.0
        %v2712 = vmax.f32 %v2191, 0.0
        %v2713 = vmax.f32 %v2643, 0.0
        %v2714 = vmax.f32 %v2194, 0.0
        %v2715 = vmax.f32 %v2646, 0.0
        %v2716 = vmax.f32 %v2197, 0.0
        %v2717 = vmax.f32 %v2649, 0.0
        %v2718 = vmax.f32 %v2200, 0.0
        %v2719 = vmax.f32 %v2652, 0.0
        %v2720 = vmax.f32 %v2203, 0.0
        %v2721 = vmax.f32 %v2655, 0.0
        %v2722 = vmax.f32 %v2206, 0.0
        %v2723 = vmax.f32 %v2658, 0.0
        %v2724 = vld [vmem:[%s5] sm:$0xff]
        %v2725 = vld [vmem:[%s5 + $0x8] sm:$0xff]
        %v2726 = vld [vmem:[%s5 + $0x10] sm:$0xff]
        %v2727 = vld [vmem:[%s5 + $0x18] sm:$0xff]
        %v2728 = vld [vmem:[%s5 + $0x20] sm:$0xff]
        %v2729 = vld [vmem:[%s5 + $0x28] sm:$0xff]
        %v2730 = vld [vmem:[%s5 + $0x30] sm:$0xff]
        %v2731 = vld [vmem:[%s5 + $0x38] sm:$0xff]
        %v2732 = vld [vmem:[%s5 + $0x40] sm:$0xff]
        %v2733 = vld [vmem:[%s5 + $0x48] sm:$0xff]
        %v2734 = vld [vmem:[%s5 + $0x50] sm:$0xff]
        %v2735 = vld [vmem:[%s5 + $0x58] sm:$0xff]
        %v2736 = vld [vmem:[%s5 + $0x60] sm:$0xff]
        %v2737 = vld [vmem:[%s5 + $0x68] sm:$0xff]
        %v2738 = vld [vmem:[%s5 + $0x70] sm:$0xff]
        %v2739 = vld [vmem:[%s5 + $0x78] sm:$0xff]
        %v2740 = vld [vmem:[%s5 + $0x80] sm:$0xff]
        %v2741 = vld [vmem:[%s5 + $0x88] sm:$0xff]
        %v2742 = vld [vmem:[%s5 + $0x90] sm:$0xff]
        %v2743 = vld [vmem:[%s5 + $0x98] sm:$0xff]
        %v2744 = vld [vmem:[%s5 + $0xa0] sm:$0xff]
        %v2745 = vld [vmem:[%s5 + $0xa8] sm:$0xff]
        %v2746 = vld [vmem:[%s5 + $0xb0] sm:$0xff]
        %v2747 = vld [vmem:[%s5 + $0xb8] sm:$0xff]
        %v2748 = vld [vmem:[%s5 + $0xc0] sm:$0xff]
        %v2749 = vld [vmem:[%s5 + $0xc8] sm:$0xff]
        %v2750 = vld [vmem:[%s5 + $0xd0] sm:$0xff]
        %v2751 = vld [vmem:[%s5 + $0xd8] sm:$0xff]
        %v2752 = vld [vmem:[%s5 + $0xe0] sm:$0xff]
        %v2753 = vld [vmem:[%s5 + $0xe8] sm:$0xff]
        %v2754 = vld [vmem:[%s5 + $0xf0] sm:$0xff]
        %v2755 = vld [vmem:[%s5 + $0xf8] sm:$0xff]
        %2757 = vset.pattern.permute.xlu0 0
        %2758 = vperm.xlu0 %2757, %v2724
        %v2759 = vpop.permute.xlu0 %2758
        %2762 = vset.pattern.permute.xlu0 0
        %2763 = vperm.xlu0 %2762, %v2725
        %v2764 = vpop.permute.xlu0 %2763
        %2767 = vset.pattern.permute.xlu0 0
        %2768 = vperm.xlu0 %2767, %v2726
        %v2769 = vpop.permute.xlu0 %2768
        %2772 = vset.pattern.permute.xlu0 0
        %2773 = vperm.xlu0 %2772, %v2727
        %v2774 = vpop.permute.xlu0 %2773
        %2777 = vset.pattern.permute.xlu0 0
        %2778 = vperm.xlu0 %2777, %v2728
        %v2779 = vpop.permute.xlu0 %2778
        %2782 = vset.pattern.permute.xlu0 0
        %2783 = vperm.xlu0 %2782, %v2729
        %v2784 = vpop.permute.xlu0 %2783
        %2787 = vset.pattern.permute.xlu0 0
        %2788 = vperm.xlu0 %2787, %v2730
        %v2789 = vpop.permute.xlu0 %2788
        %2792 = vset.pattern.permute.xlu0 0
        %2793 = vperm.xlu0 %2792, %v2731
        %v2794 = vpop.permute.xlu0 %2793
        %2797 = vset.pattern.permute.xlu0 0
        %2798 = vperm.xlu0 %2797, %v2732
        %v2799 = vpop.permute.xlu0 %2798
        %2802 = vset.pattern.permute.xlu0 0
        %2803 = vperm.xlu0 %2802, %v2733
        %v2804 = vpop.permute.xlu0 %2803
        %2807 = vset.pattern.permute.xlu0 0
        %2808 = vperm.xlu0 %2807, %v2734
        %v2809 = vpop.permute.xlu0 %2808
        %2812 = vset.pattern.permute.xlu0 0
        %2813 = vperm.xlu0 %2812, %v2735
        %v2814 = vpop.permute.xlu0 %2813
        %2817 = vset.pattern.permute.xlu0 0
        %2818 = vperm.xlu0 %2817, %v2736
        %v2819 = vpop.permute.xlu0 %2818
        %2822 = vset.pattern.permute.xlu0 0
        %2823 = vperm.xlu0 %2822, %v2737
        %v2824 = vpop.permute.xlu0 %2823
        %2827 = vset.pattern.permute.xlu0 0
        %2828 = vperm.xlu0 %2827, %v2738
        %v2829 = vpop.permute.xlu0 %2828
        %2832 = vset.pattern.permute.xlu0 0
        %2833 = vperm.xlu0 %2832, %v2739
        %v2834 = vpop.permute.xlu0 %2833
        %2837 = vset.pattern.permute.xlu0 0
        %2838 = vperm.xlu0 %2837, %v2740
        %v2839 = vpop.permute.xlu0 %2838
        %2842 = vset.pattern.permute.xlu0 0
        %2843 = vperm.xlu0 %2842, %v2741
        %v2844 = vpop.permute.xlu0 %2843
        %2847 = vset.pattern.permute.xlu0 0
        %2848 = vperm.xlu0 %2847, %v2742
        %v2849 = vpop.permute.xlu0 %2848
        %2852 = vset.pattern.permute.xlu0 0
        %2853 = vperm.xlu0 %2852, %v2743
        %v2854 = vpop.permute.xlu0 %2853
        %2857 = vset.pattern.permute.xlu0 0
        %2858 = vperm.xlu0 %2857, %v2744
        %v2859 = vpop.permute.xlu0 %2858
        %2862 = vset.pattern.permute.xlu0 0
        %2863 = vperm.xlu0 %2862, %v2745
        %v2864 = vpop.permute.xlu0 %2863
        %2867 = vset.pattern.permute.xlu0 0
        %2868 = vperm.xlu0 %2867, %v2746
        %v2869 = vpop.permute.xlu0 %2868
        %2872 = vset.pattern.permute.xlu0 0
        %2873 = vperm.xlu0 %2872, %v2747
        %v2874 = vpop.permute.xlu0 %2873
        %2877 = vset.pattern.permute.xlu0 0
        %2878 = vperm.xlu0 %2877, %v2748
        %v2879 = vpop.permute.xlu0 %2878
        %2882 = vset.pattern.permute.xlu0 0
        %2883 = vperm.xlu0 %2882, %v2749
        %v2884 = vpop.permute.xlu0 %2883
        %2887 = vset.pattern.permute.xlu0 0
        %2888 = vperm.xlu0 %2887, %v2750
        %v2889 = vpop.permute.xlu0 %2888
        %2892 = vset.pattern.permute.xlu0 0
        %2893 = vperm.xlu0 %2892, %v2751
        %v2894 = vpop.permute.xlu0 %2893
        %2897 = vset.pattern.permute.xlu0 0
        %2898 = vperm.xlu0 %2897, %v2752
        %v2899 = vpop.permute.xlu0 %2898
        %2902 = vset.pattern.permute.xlu0 0
        %2903 = vperm.xlu0 %2902, %v2753
        %v2904 = vpop.permute.xlu0 %2903
        %2907 = vset.pattern.permute.xlu0 0
        %2908 = vperm.xlu0 %2907, %v2754
        %v2909 = vpop.permute.xlu0 %2908
        %2912 = vset.pattern.permute.xlu0 0
        %2913 = vperm.xlu0 %2912, %v2755
        %v2914 = vpop.permute.xlu0 %2913
        %v2916 = vmul.f32 %v2759, %v2660
        %v2917 = vmul.f32 %v2759, %v2661
        %v2918 = vmul.f32 %v2764, %v2662
        %v2919 = vmul.f32 %v2764, %v2663
        %v2920 = vmul.f32 %v2769, %v2664
        %v2921 = vmul.f32 %v2769, %v2665
        %v2922 = vmul.f32 %v2774, %v2666
        %v2923 = vmul.f32 %v2774, %v2667
        %v2924 = vmul.f32 %v2779, %v2668
        %v2925 = vmul.f32 %v2779, %v2669
        %v2926 = vmul.f32 %v2784, %v2670
        %v2927 = vmul.f32 %v2784, %v2671
        %v2928 = vmul.f32 %v2789, %v2672
        %v2929 = vmul.f32 %v2789, %v2673
        %v2930 = vmul.f32 %v2794, %v2674
        %v2931 = vmul.f32 %v2794, %v2675
        %v2932 = vmul.f32 %v2799, %v2676
        %v2933 = vmul.f32 %v2799, %v2677
        %v2934 = vmul.f32 %v2804, %v2678
        %v2935 = vmul.f32 %v2804, %v2679
        %v2936 = vmul.f32 %v2809, %v2680
        %v2937 = vmul.f32 %v2809, %v2681
        %v2938 = vmul.f32 %v2814, %v2682
        %v2939 = vmul.f32 %v2814, %v2683
        %v2940 = vmul.f32 %v2819, %v2684
        %v2941 = vmul.f32 %v2819, %v2685
        %v2942 = vmul.f32 %v2824, %v2686
        %v2943 = vmul.f32 %v2824, %v2687
        %v2944 = vmul.f32 %v2829, %v2688
        %v2945 = vmul.f32 %v2829, %v2689
        %v2946 = vmul.f32 %v2834, %v2690
        %v2947 = vmul.f32 %v2834, %v2691
        %v2948 = vmul.f32 %v2839, %v2692
        %v2949 = vmul.f32 %v2839, %v2693
        %v2950 = vmul.f32 %v2844, %v2694
        %v2951 = vmul.f32 %v2844, %v2695
        %v2952 = vmul.f32 %v2849, %v2696
        %v2953 = vmul.f32 %v2849, %v2697
        %v2954 = vmul.f32 %v2854, %v2698
        %v2955 = vmul.f32 %v2854, %v2699
        %v2956 = vmul.f32 %v2859, %v2700
        %v2957 = vmul.f32 %v2859, %v2701
        %v2958 = vmul.f32 %v2864, %v2702
        %v2959 = vmul.f32 %v2864, %v2703
        %v2960 = vmul.f32 %v2869, %v2704
        %v2961 = vmul.f32 %v2869, %v2705
        %v2962 = vmul.f32 %v2874, %v2706
        %v2963 = vmul.f32 %v2874, %v2707
        %v2964 = vmul.f32 %v2879, %v2708
        %v2965 = vmul.f32 %v2879, %v2709
        %v2966 = vmul.f32 %v2884, %v2710
        %v2967 = vmul.f32 %v2884, %v2711
        %v2968 = vmul.f32 %v2889, %v2712
        %v2969 = vmul.f32 %v2889, %v2713
        %v2970 = vmul.f32 %v2894, %v2714
        %v2971 = vmul.f32 %v2894, %v2715
        %v2972 = vmul.f32 %v2899, %v2716
        %v2973 = vmul.f32 %v2899, %v2717
        %v2974 = vmul.f32 %v2904, %v2718
        %v2975 = vmul.f32 %v2904, %v2719
        %v2976 = vmul.f32 %v2909, %v2720
        %v2977 = vmul.f32 %v2909, %v2721
        %v2978 = vmul.f32 %v2914, %v2722
        %v2979 = vmul.f32 %v2914, %v2723
        %v2980 = vadd.f32 %v2916, %v2918
        %v2981 = vadd.f32 %v2980, %v2920
        %v2982 = vadd.f32 %v2981, %v2922
        %v2983 = vadd.f32 %v2982, %v2924
        %v2984 = vadd.f32 %v2983, %v2926
        %v2985 = vadd.f32 %v2984, %v2928
        %v2986 = vadd.f32 %v2985, %v2930
        %v2987 = vadd.f32 %v2986, %v2932
        %v2988 = vadd.f32 %v2987, %v2934
        %v2989 = vadd.f32 %v2988, %v2936
        %v2990 = vadd.f32 %v2989, %v2938
        %v2991 = vadd.f32 %v2990, %v2940
        %v2992 = vadd.f32 %v2991, %v2942
        %v2993 = vadd.f32 %v2992, %v2944
        %v2994 = vadd.f32 %v2993, %v2946
        %v2995 = vadd.f32 %v2994, %v2948
        %v2996 = vadd.f32 %v2995, %v2950
        %v2997 = vadd.f32 %v2996, %v2952
        %v2998 = vadd.f32 %v2997, %v2954
        %v2999 = vadd.f32 %v2998, %v2956
        %v3000 = vadd.f32 %v2999, %v2958
        %v3001 = vadd.f32 %v3000, %v2960
        %v3002 = vadd.f32 %v3001, %v2962
        %v3003 = vadd.f32 %v3002, %v2964
        %v3004 = vadd.f32 %v3003, %v2966
        %v3005 = vadd.f32 %v3004, %v2968
        %v3006 = vadd.f32 %v3005, %v2970
        %v3007 = vadd.f32 %v3006, %v2972
        %v3008 = vadd.f32 %v3007, %v2974
        %v3009 = vadd.f32 %v3008, %v2976
        %v3010 = vadd.f32 %v3009, %v2978
        %v3011 = vrot.slane %v3010, 4
        %v3012 = vadd.f32 %v3010, %v3011
        %v3013 = vrot.slane %v3012, 2
        %v3014 = vadd.f32 %v3012, %v3013
        %v3015 = vrot.slane %v3014, 1
        %v3016 = vadd.f32 %v3014, %v3015
        %v3017 = vadd.f32 %v2917, %v2919
        %v3018 = vadd.f32 %v3017, %v2921
        %v3019 = vadd.f32 %v3018, %v2923
        %v3020 = vadd.f32 %v3019, %v2925
        %v3021 = vadd.f32 %v3020, %v2927
        %v3022 = vadd.f32 %v3021, %v2929
        %v3023 = vadd.f32 %v3022, %v2931
        %v3024 = vadd.f32 %v3023, %v2933
        %v3025 = vadd.f32 %v3024, %v2935
        %v3026 = vadd.f32 %v3025, %v2937
        %v3027 = vadd.f32 %v3026, %v2939
        %v3028 = vadd.f32 %v3027, %v2941
        %v3029 = vadd.f32 %v3028, %v2943
        %v3030 = vadd.f32 %v3029, %v2945
        %v3031 = vadd.f32 %v3030, %v2947
        %v3032 = vadd.f32 %v3031, %v2949
        %v3033 = vadd.f32 %v3032, %v2951
        %v3034 = vadd.f32 %v3033, %v2953
        %v3035 = vadd.f32 %v3034, %v2955
        %v3036 = vadd.f32 %v3035, %v2957
        %v3037 = vadd.f32 %v3036, %v2959
        %v3038 = vadd.f32 %v3037, %v2961
        %v3039 = vadd.f32 %v3038, %v2963
        %v3040 = vadd.f32 %v3039, %v2965
        %v3041 = vadd.f32 %v3040, %v2967
        %v3042 = vadd.f32 %v3041, %v2969
        %v3043 = vadd.f32 %v3042, %v2971
        %v3044 = vadd.f32 %v3043, %v2973
        %v3045 = vadd.f32 %v3044, %v2975
        %v3046 = vadd.f32 %v3045, %v2977
        %v3047 = vadd.f32 %v3046, %v2979
        %v3048 = vrot.slane %v3047, 4
        %v3049 = vadd.f32 %v3047, %v3048
        %v3050 = vrot.slane %v3049, 2
        %v3051 = vadd.f32 %v3049, %v3050
        %v3052 = vrot.slane %v3051, 1
        %v3053 = vadd.f32 %v3051, %v3052
        %s3054 = sld [smem:[#allocation2]]
        %v3055 = vstv %s3054
        %v3056 = vadd.f32 %v3016, %v3055
        %v3057 = vadd.f32 %v3053, %v3055
        %v3060 = vrot.slane %v3057, 7
        %vm3061 = vcmask 1040384
        %v3062 = vsel %vm3061, %v3056, %v3060
        %v3064 = vlaneseq
        %vm3065 = vcmp.ge.s32.totalorder %v3064, 0
        %vm3066 = vcmp.lt.s32.totalorder %v3064, 256
        %vm3067 = vmand %vm3065, %vm3066
        %3068 = vst.msk [vmem:[%s271] sm:$0x3] %vm3067, %v3062
        %s3069 = sand.u32 %s182, 1
        %s3070 = scalar_lea.sflag [#allocation4], %s3069
        %s3071 = sand.u32 %s182, 1
        %s3072 = smul.addr %s3071, 2
        %s3073 = scalar_lea.vmem [#allocation3], %s3072
        // Predicated region
        $region49: #{tpu_custom_call.1} parent=47 // pred_check
          %p3074 = pneg %p192
        $region50: #{tpu_custom_call.1} parent=47 // pred_check_branch
          %3076 = sbr.rel (%p3074) target = $region52
        $region51: #{tpu_custom_call.1} parent=47 // pred_region
          %s3077 = smul.u32 2, %s22
          %3079 = vsyncadd %s3070, 0
          %s3080 = scalar_lea.hbm %s7, %s3077
          %s3082 = sshll.u32 %s3073, 4
          %s3083 = int_to_ptr.vmem [resolvable:$true] %s3082
          %s3084 = sshll.u32 %s3080, 4
          %s3085 = int_to_ptr.hbm [resolvable:$true] %s3084
          %3087 = dma.vmem_to_hbm [thread:$0]  %s3083, 32, %s3085, %s3070
        $region52: #{tpu_custom_call.1} parent=47 // pred_fallthru
          _
      $region48: #{tpu_custom_call.1} parent=5 // pred_fallthru
        _
      %p3088 = scmp.le.s32.totalorder 2, %s17
      // Predicated region
      $region53: #{tpu_custom_call.1} parent=5 // pred_check
        %p3089 = pneg %p3088
      $region54: #{tpu_custom_call.1} parent=5 // pred_check_branch
        %3091 = sbr.rel (%p3089) target = $region56
      $region55: #{tpu_custom_call.1} parent=5 // pred_region
        %s3092 = ssub.s32 %s17, 2
        // Predicated region
        $region57: #{tpu_custom_call.1} parent=55 // pred_check
          %p3093 = pneg %p198
        $region58: #{tpu_custom_call.1} parent=55 // pred_check_branch
          %3095 = sbr.rel (%p3093) target = $region60
        $region59: #{tpu_custom_call.1} parent=55 // pred_region
          %s3096 = sand.u32 %s183, 1
          %s3097 = scalar_lea.sflag [#allocation4], %s3096
          %s3098 = sand.u32 %s183, 1
          %s3099 = smul.addr %s3098, 2
          %s3100 = scalar_lea.vmem [#allocation3], %s3099
          %3102 = dma.done %s3097, 32
        $region60: #{tpu_custom_call.1} parent=55 // pred_fallthru
          _
      $region56: #{tpu_custom_call.1} parent=5 // pred_fallthru
        _
    $region6: #{tpu_custom_call.1} parent=1 // loop_footer
      %s21 = sadd.s32 1, %s17
    $region7: #{tpu_custom_call.1} parent=1 // loop_footer_branch
      %16 = sbr.rel target = $region3
    $region8: #{tpu_custom_call.1} parent=1 // loop_exit
      _
    %3103 = vsyncpa [#allocation4], 1
    %s3104 = scalar_lea.sflag [#allocation4], 1
    %3105 = vsyncpa %s3104, 1

</llo_original>
